<compile_context>
chip_gen: v7x
topology: tpu7x:2x2x1
jax: 0.10.0
libtpu: 0.0.40
codegen_flags: <defaults>
</compile_context>

<pallas_src>
import functools

import jax
import jax.numpy as jnp
from jax.experimental import pallas as pl
from jax.experimental.pallas import tpu as pltpu

C_IN = 3
# TODO(synk): the original module uses ConvTranspose2d(3, 2, ...) whose 2-channel
# output cannot broadcast-add with the 3-channel avg-pool result (the literal
# PyTorch forward raises a shape error); we use 3 output channels so the forward
# is well-defined while keeping every op's semantics.
C_OUT = 3
K = 3


def _fused_kernel(W, x_ref, w_ref, b_ref, o_ref):
    # x_ref : (C_IN, H, LB)        f32 VMEM, LB = TB*W (batch packed on lanes)
    # w_ref : (C_OUT*C_IN*K*K,)    f32 SMEM, flat [co][ci][kh][kw], pre-flipped
    # b_ref : (C_OUT,)             f32 SMEM
    # o_ref : (5*C_IN, H, LB)      f32 VMEM, channels = [v1, v2, v3, x, v4]
    _, H, LB = x_ref.shape
    f32 = jnp.float32

    # ---- hoisted scalar reads: weights / bias read once per grid step -------
    wv = [[[[w_ref[((co * C_IN + ci) * K + kh) * K + kw] for kw in range(K)]
            for kh in range(K)] for ci in range(C_IN)] for co in range(C_OUT)]
    bv = [b_ref[co] for co in range(C_OUT)]

    # ---- per-pixel validity masks + pool edge-count map (once per step) -----
    row = jax.lax.broadcasted_iota(jnp.int32, (H, LB), 0)
    col = jax.lax.broadcasted_iota(jnp.int32, (H, LB), 1) % W
    r_ok = {-1: row >= 1, 0: None, 1: row <= H - 2}
    c_ok = {-1: col >= 1, 0: None, 1: col <= W - 2}
    cnt_h = 1.0 + (row >= 1).astype(f32) + (row <= H - 2).astype(f32)
    cnt_w = 1.0 + (col >= 1).astype(f32) + (col <= W - 2).astype(f32)
    inv_cnt = 1.0 / (cnt_h * cnt_w)          # exact; one divide per grid step

    x = x_ref[...]                           # (C_IN, H, LB), one wide load

    # Row-shifted copies (sublane rotate on the XLU); wrapped rows get masked.
    xr = {0: x,
          -1: pltpu.roll(x, shift=1, axis=1),
          1: pltpu.roll(x, shift=H - 1, axis=1)}

    acc = [jnp.zeros((H, LB), f32) + bv[co] for co in range(C_OUT)]
    psum = None
    for dh in (-1, 0, 1):
        for dw in (-1, 0, 1):
            t = xr[dh]
            if dw != 0:
                # Lane rotate; wrap across image/column boundaries is masked.
                t = pltpu.roll(t, shift=(-dw) % LB, axis=2)
            mm = None
            if r_ok[dh] is not None and c_ok[dw] is not None:
                mm = jnp.logical_and(r_ok[dh], c_ok[dw])
            elif r_ok[dh] is not None:
                mm = r_ok[dh]
            elif c_ok[dw] is not None:
                mm = c_ok[dw]
            if mm is not None:
                t = jnp.where(mm, t, 0.0)    # zero out-of-image taps
            psum = t if psum is None else psum + t
            kh, kw = dh + 1, dw + 1
            for co in range(C_OUT):
                for ci in range(C_IN):
                    acc[co] = acc[co] + wv[co][ci][kh][kw] * t[ci]

    v3 = psum * inv_cnt                      # (C_IN, H, LB)

    # ---- coalesced, lane-dense stores ---------------------------------------
    o_ref[2 * C_IN:3 * C_IN] = v3            # avg-pool planes, one wide store
    o_ref[3 * C_IN:4 * C_IN] = x             # passthrough x, one wide store
    for co in range(C_OUT):
        v1c = acc[co]
        v2c = jnp.tanh(v1c) + v3[co]
        o_ref[co] = v1c
        o_ref[C_OUT + co] = v2c
        o_ref[4 * C_IN + co] = jnp.maximum(v2c, 0.0)


def _vmem_limit_bytes():
    """Generation-aware VMEM limit (v7x: 64 MiB physical; v5e/v6e: 128 MiB)."""
    cap = None
    try:
        cap = getattr(pltpu.get_tpu_info(), "vmem_capacity_bytes", None)
    except Exception:
        cap = None
    if not cap:
        cap = 64 * 1024 * 1024               # conservative default (v7x)
    return min(int(cap * 3 // 4), 100 * 1024 * 1024)


def _pick_block_batch(N, H, W, budget_bytes):
    """Images per grid step: last block dim TB*W must be a multiple of 128 (or
    the whole batch); footprint-aware; prefer >= 2 grid steps when possible."""
    per_img = (C_IN + 5 * C_IN) * H * W * 4 * 2   # in+out planes, double-buffered
    divs = [d for d in range(1, N + 1) if N % d == 0]
    lane_ok = [d for d in divs if (d * W) % 128 == 0 or d == N]
    fits = [d for d in lane_ok if d * per_img <= budget_bytes]
    if fits:
        two_steps = [d for d in fits if N // d >= 2]
        return max(two_steps) if two_steps else max(fits)
    return min(lane_ok)


def model_forward(x, wt, bias):
    """x: (N, C_IN, H, W) f32; wt: ConvTranspose2d weight (C_IN, C_OUT, K, K); bias: (C_OUT,)."""
    N, C, H, W = x.shape
    assert C == C_IN

    vmem_limit = _vmem_limit_bytes()
    TB = _pick_block_batch(N, H, W, vmem_limit // 4)
    LB = TB * W

    # ConvTranspose2d(stride=1, pad=1) == Conv2d(pad=1) with the kernel flipped
    # and in/out channel axes swapped: w_conv[co,ci,kh,kw] = wt[ci,co,2-kh,2-kw]
    w_conv = jnp.transpose(wt, (1, 0, 2, 3))[:, :, ::-1, ::-1]   # (C_OUT, C_IN, K, K)
    w_flat = w_conv.reshape(-1)                                  # [co][ci][kh][kw] flat

    # Lane-dense layout: pack the batch on the lane (last) axis.
    xk = jnp.transpose(x, (1, 2, 0, 3)).reshape(C_IN, H, N * W)

    ok = pl.pallas_call(
        functools.partial(_fused_kernel, W),
        out_shape=jax.ShapeDtypeStruct((5 * C_IN, H, N * W), jnp.float32),
        grid=(N // TB,),
        in_specs=[
            pl.BlockSpec((C_IN, H, LB), lambda i: (0, 0, i)),
            pl.BlockSpec(memory_space=pltpu.MemorySpace.SMEM),
            pl.BlockSpec(memory_space=pltpu.MemorySpace.SMEM),
        ],
        out_specs=pl.BlockSpec((5 * C_IN, H, LB), lambda i: (0, 0, i)),
        compiler_params=pltpu.CompilerParams(
            dimension_semantics=("parallel",),
            vmem_limit_bytes=vmem_limit,
        ),
    )(xk, w_flat, bias)

    return jnp.transpose(ok.reshape(5 * C_IN, H, N, W), (2, 0, 1, 3))


def ref_forward(x, wt, bias):
    """Pure-JAX reference of the (fixed) PyTorch forward."""
    w_conv = jnp.transpose(wt, (1, 0, 2, 3))[:, :, ::-1, ::-1]
    v1 = jax.lax.conv_general_dilated(
        x, w_conv, window_strides=(1, 1), padding=((1, 1), (1, 1)),
        dimension_numbers=("NCHW", "OIHW", "NCHW")) + bias[None, :, None, None]
    s = jax.lax.reduce_window(x, 0.0, jax.lax.add, (1, 1, 3, 3), (1, 1, 1, 1),
                              ((0, 0), (0, 0), (1, 1), (1, 1)))
    c = jax.lax.reduce_window(jnp.ones_like(x), 0.0, jax.lax.add, (1, 1, 3, 3),
                              (1, 1, 1, 1), ((0, 0), (0, 0), (1, 1), (1, 1)))
    v3 = s / c
    v2 = jnp.tanh(v1) + v3
    v4 = jnp.maximum(v2, 0.0)
    return jnp.concatenate([v1, v2, v3, x, v4], axis=1)


if __name__ == "__main__":
    key = jax.random.PRNGKey(0)
    kx, kw, kb = jax.random.split(key, 3)

    N, H, W = 16, 16, 16            # small; kernel blocks get 8*16=128 lanes, 2 grid steps
    x = jax.random.normal(kx, (N, C_IN, H, W), dtype=jnp.float32)

    # Deterministic parameter init (ConvTranspose2d weight shape: (C_in, C_out, kH, kW))
    bound = 1.0 / ((C_IN * K * K) ** 0.5)
    wt = jax.random.uniform(kw, (C_IN, C_OUT, K, K), jnp.float32, -bound, bound)
    bias = jax.random.uniform(kb, (C_OUT,), jnp.float32, -bound, bound)

    out = jax.block_until_ready(model_forward(x, wt, bias))
    ref = ref_forward(x, wt, bias)

    assert out.shape == (N, 5 * C_IN, H, W)
    if not jnp.allclose(out, ref, atol=1e-4, rtol=1e-5):
        raise SystemExit("mismatch: max abs err %e" % float(jnp.max(jnp.abs(out - ref))))
    print("KERNEL_OK")
</pallas_src>

<mosaic_0001>
module attributes {stable_mosaic.version = 11 : i64} {
  func.func @_fused_kernel(%arg0: i32, %arg1: memref<3x16x128xf32, #tpu.memory_space<vmem>>, %arg2: memref<81xf32, #tpu.memory_space<smem>>, %arg3: memref<3xf32, #tpu.memory_space<smem>>, %arg4: memref<15x16x128xf32, #tpu.memory_space<vmem>>) attributes {dimension_semantics = [#tpu.dimension_semantics<parallel>], iteration_bounds = array<i64: 2>, scalar_prefetch = 0 : i64, scratch_operands = 0 : i64, tpu.core_type = #tpu.core_type<tc>, window_params = [{transform_indices = @transform_0, window_bounds = array<i64: 3, 16, 128>}, {transform_indices = @transform_1, window_bounds = array<i64: 81>}, {transform_indices = @transform_2, window_bounds = array<i64: 3>}, {transform_indices = @transform_3, window_bounds = array<i64: 15, 16, 128>}]} {
    %c0 = arith.constant 0 : index
    %0 = memref.load %arg2[%c0] : memref<81xf32, #tpu.memory_space<smem>>
    %c1 = arith.constant 1 : index
    %1 = memref.load %arg2[%c1] : memref<81xf32, #tpu.memory_space<smem>>
    %c2 = arith.constant 2 : index
    %2 = memref.load %arg2[%c2] : memref<81xf32, #tpu.memory_space<smem>>
    %c3 = arith.constant 3 : index
    %3 = memref.load %arg2[%c3] : memref<81xf32, #tpu.memory_space<smem>>
    %c4 = arith.constant 4 : index
    %4 = memref.load %arg2[%c4] : memref<81xf32, #tpu.memory_space<smem>>
    %c5 = arith.constant 5 : index
    %5 = memref.load %arg2[%c5] : memref<81xf32, #tpu.memory_space<smem>>
    %c6 = arith.constant 6 : index
    %6 = memref.load %arg2[%c6] : memref<81xf32, #tpu.memory_space<smem>>
    %c7 = arith.constant 7 : index
    %7 = memref.load %arg2[%c7] : memref<81xf32, #tpu.memory_space<smem>>
    %c8 = arith.constant 8 : index
    %8 = memref.load %arg2[%c8] : memref<81xf32, #tpu.memory_space<smem>>
    %c9 = arith.constant 9 : index
    %9 = memref.load %arg2[%c9] : memref<81xf32, #tpu.memory_space<smem>>
    %c10 = arith.constant 10 : index
    %10 = memref.load %arg2[%c10] : memref<81xf32, #tpu.memory_space<smem>>
    %c11 = arith.constant 11 : index
    %11 = memref.load %arg2[%c11] : memref<81xf32, #tpu.memory_space<smem>>
    %c12 = arith.constant 12 : index
    %12 = memref.load %arg2[%c12] : memref<81xf32, #tpu.memory_space<smem>>
    %c13 = arith.constant 13 : index
    %13 = memref.load %arg2[%c13] : memref<81xf32, #tpu.memory_space<smem>>
    %c14 = arith.constant 14 : index
    %14 = memref.load %arg2[%c14] : memref<81xf32, #tpu.memory_space<smem>>
    %c15 = arith.constant 15 : index
    %15 = memref.load %arg2[%c15] : memref<81xf32, #tpu.memory_space<smem>>
    %c16 = arith.constant 16 : index
    %16 = memref.load %arg2[%c16] : memref<81xf32, #tpu.memory_space<smem>>
    %c17 = arith.constant 17 : index
    %17 = memref.load %arg2[%c17] : memref<81xf32, #tpu.memory_space<smem>>
    %c18 = arith.constant 18 : index
    %18 = memref.load %arg2[%c18] : memref<81xf32, #tpu.memory_space<smem>>
    %c19 = arith.constant 19 : index
    %19 = memref.load %arg2[%c19] : memref<81xf32, #tpu.memory_space<smem>>
    %c20 = arith.constant 20 : index
    %20 = memref.load %arg2[%c20] : memref<81xf32, #tpu.memory_space<smem>>
    %c21 = arith.constant 21 : index
    %21 = memref.load %arg2[%c21] : memref<81xf32, #tpu.memory_space<smem>>
    %c22 = arith.constant 22 : index
    %22 = memref.load %arg2[%c22] : memref<81xf32, #tpu.memory_space<smem>>
    %c23 = arith.constant 23 : index
    %23 = memref.load %arg2[%c23] : memref<81xf32, #tpu.memory_space<smem>>
    %c24 = arith.constant 24 : index
    %24 = memref.load %arg2[%c24] : memref<81xf32, #tpu.memory_space<smem>>
    %c25 = arith.constant 25 : index
    %25 = memref.load %arg2[%c25] : memref<81xf32, #tpu.memory_space<smem>>
    %c26 = arith.constant 26 : index
    %26 = memref.load %arg2[%c26] : memref<81xf32, #tpu.memory_space<smem>>
    %c27 = arith.constant 27 : index
    %27 = memref.load %arg2[%c27] : memref<81xf32, #tpu.memory_space<smem>>
    %c28 = arith.constant 28 : index
    %28 = memref.load %arg2[%c28] : memref<81xf32, #tpu.memory_space<smem>>
    %c29 = arith.constant 29 : index
    %29 = memref.load %arg2[%c29] : memref<81xf32, #tpu.memory_space<smem>>
    %c30 = arith.constant 30 : index
    %30 = memref.load %arg2[%c30] : memref<81xf32, #tpu.memory_space<smem>>
    %c31 = arith.constant 31 : index
    %31 = memref.load %arg2[%c31] : memref<81xf32, #tpu.memory_space<smem>>
    %c32 = arith.constant 32 : index
    %32 = memref.load %arg2[%c32] : memref<81xf32, #tpu.memory_space<smem>>
    %c33 = arith.constant 33 : index
    %33 = memref.load %arg2[%c33] : memref<81xf32, #tpu.memory_space<smem>>
    %c34 = arith.constant 34 : index
    %34 = memref.load %arg2[%c34] : memref<81xf32, #tpu.memory_space<smem>>
    %c35 = arith.constant 35 : index
    %35 = memref.load %arg2[%c35] : memref<81xf32, #tpu.memory_space<smem>>
    %c36 = arith.constant 36 : index
    %36 = memref.load %arg2[%c36] : memref<81xf32, #tpu.memory_space<smem>>
    %c37 = arith.constant 37 : index
    %37 = memref.load %arg2[%c37] : memref<81xf32, #tpu.memory_space<smem>>
    %c38 = arith.constant 38 : index
    %38 = memref.load %arg2[%c38] : memref<81xf32, #tpu.memory_space<smem>>
    %c39 = arith.constant 39 : index
    %39 = memref.load %arg2[%c39] : memref<81xf32, #tpu.memory_space<smem>>
    %c40 = arith.constant 40 : index
    %40 = memref.load %arg2[%c40] : memref<81xf32, #tpu.memory_space<smem>>
    %c41 = arith.constant 41 : index
    %41 = memref.load %arg2[%c41] : memref<81xf32, #tpu.memory_space<smem>>
    %c42 = arith.constant 42 : index
    %42 = memref.load %arg2[%c42] : memref<81xf32, #tpu.memory_space<smem>>
    %c43 = arith.constant 43 : index
    %43 = memref.load %arg2[%c43] : memref<81xf32, #tpu.memory_space<smem>>
    %c44 = arith.constant 44 : index
    %44 = memref.load %arg2[%c44] : memref<81xf32, #tpu.memory_space<smem>>
    %c45 = arith.constant 45 : index
    %45 = memref.load %arg2[%c45] : memref<81xf32, #tpu.memory_space<smem>>
    %c46 = arith.constant 46 : index
    %46 = memref.load %arg2[%c46] : memref<81xf32, #tpu.memory_space<smem>>
    %c47 = arith.constant 47 : index
    %47 = memref.load %arg2[%c47] : memref<81xf32, #tpu.memory_space<smem>>
    %c48 = arith.constant 48 : index
    %48 = memref.load %arg2[%c48] : memref<81xf32, #tpu.memory_space<smem>>
    %c49 = arith.constant 49 : index
    %49 = memref.load %arg2[%c49] : memref<81xf32, #tpu.memory_space<smem>>
    %c50 = arith.constant 50 : index
    %50 = memref.load %arg2[%c50] : memref<81xf32, #tpu.memory_space<smem>>
    %c51 = arith.constant 51 : index
    %51 = memref.load %arg2[%c51] : memref<81xf32, #tpu.memory_space<smem>>
    %c52 = arith.constant 52 : index
    %52 = memref.load %arg2[%c52] : memref<81xf32, #tpu.memory_space<smem>>
    %c53 = arith.constant 53 : index
    %53 = memref.load %arg2[%c53] : memref<81xf32, #tpu.memory_space<smem>>
    %c54 = arith.constant 54 : index
    %54 = memref.load %arg2[%c54] : memref<81xf32, #tpu.memory_space<smem>>
    %c55 = arith.constant 55 : index
    %55 = memref.load %arg2[%c55] : memref<81xf32, #tpu.memory_space<smem>>
    %c56 = arith.constant 56 : index
    %56 = memref.load %arg2[%c56] : memref<81xf32, #tpu.memory_space<smem>>
    %c57 = arith.constant 57 : index
    %57 = memref.load %arg2[%c57] : memref<81xf32, #tpu.memory_space<smem>>
    %c58 = arith.constant 58 : index
    %58 = memref.load %arg2[%c58] : memref<81xf32, #tpu.memory_space<smem>>
    %c59 = arith.constant 59 : index
    %59 = memref.load %arg2[%c59] : memref<81xf32, #tpu.memory_space<smem>>
    %c60 = arith.constant 60 : index
    %60 = memref.load %arg2[%c60] : memref<81xf32, #tpu.memory_space<smem>>
    %c61 = arith.constant 61 : index
    %61 = memref.load %arg2[%c61] : memref<81xf32, #tpu.memory_space<smem>>
    %c62 = arith.constant 62 : index
    %62 = memref.load %arg2[%c62] : memref<81xf32, #tpu.memory_space<smem>>
    %c63 = arith.constant 63 : index
    %63 = memref.load %arg2[%c63] : memref<81xf32, #tpu.memory_space<smem>>
    %c64 = arith.constant 64 : index
    %64 = memref.load %arg2[%c64] : memref<81xf32, #tpu.memory_space<smem>>
    %c65 = arith.constant 65 : index
    %65 = memref.load %arg2[%c65] : memref<81xf32, #tpu.memory_space<smem>>
    %c66 = arith.constant 66 : index
    %66 = memref.load %arg2[%c66] : memref<81xf32, #tpu.memory_space<smem>>
    %c67 = arith.constant 67 : index
    %67 = memref.load %arg2[%c67] : memref<81xf32, #tpu.memory_space<smem>>
    %c68 = arith.constant 68 : index
    %68 = memref.load %arg2[%c68] : memref<81xf32, #tpu.memory_space<smem>>
    %c69 = arith.constant 69 : index
    %69 = memref.load %arg2[%c69] : memref<81xf32, #tpu.memory_space<smem>>
    %c70 = arith.constant 70 : index
    %70 = memref.load %arg2[%c70] : memref<81xf32, #tpu.memory_space<smem>>
    %c71 = arith.constant 71 : index
    %71 = memref.load %arg2[%c71] : memref<81xf32, #tpu.memory_space<smem>>
    %c72 = arith.constant 72 : index
    %72 = memref.load %arg2[%c72] : memref<81xf32, #tpu.memory_space<smem>>
    %c73 = arith.constant 73 : index
    %73 = memref.load %arg2[%c73] : memref<81xf32, #tpu.memory_space<smem>>
    %c74 = arith.constant 74 : index
    %74 = memref.load %arg2[%c74] : memref<81xf32, #tpu.memory_space<smem>>
    %c75 = arith.constant 75 : index
    %75 = memref.load %arg2[%c75] : memref<81xf32, #tpu.memory_space<smem>>
    %c76 = arith.constant 76 : index
    %76 = memref.load %arg2[%c76] : memref<81xf32, #tpu.memory_space<smem>>
    %c77 = arith.constant 77 : index
    %77 = memref.load %arg2[%c77] : memref<81xf32, #tpu.memory_space<smem>>
    %c78 = arith.constant 78 : index
    %78 = memref.load %arg2[%c78] : memref<81xf32, #tpu.memory_space<smem>>
    %c79 = arith.constant 79 : index
    %79 = memref.load %arg2[%c79] : memref<81xf32, #tpu.memory_space<smem>>
    %c80 = arith.constant 80 : index
    %80 = memref.load %arg2[%c80] : memref<81xf32, #tpu.memory_space<smem>>
    %c0_0 = arith.constant 0 : index
    %81 = memref.load %arg3[%c0_0] : memref<3xf32, #tpu.memory_space<smem>>
    %c1_1 = arith.constant 1 : index
    %82 = memref.load %arg3[%c1_1] : memref<3xf32, #tpu.memory_space<smem>>
    %c2_2 = arith.constant 2 : index
    %83 = memref.load %arg3[%c2_2] : memref<3xf32, #tpu.memory_space<smem>>
    %84 = tpu.iota {dimensions = array<i32: 0>} : vector<16x128xi32>
    %85 = tpu.iota {dimensions = array<i32: 1>} : vector<16x128xi32>
    %c16_i32 = arith.constant 16 : i32
    %c0_i32 = arith.constant 0 : i32
    %86 = arith.cmpi eq, %c16_i32, %c0_i32 : i32
    %c1_i32 = arith.constant 1 : i32
    %87 = arith.select %86, %c1_i32, %c16_i32 : i32
    %88 = vector.broadcast %87 : i32 to vector<16x128xi32>
    %89 = arith.remsi %85, %88 : vector<16x128xi32>
    %c0_i32_3 = arith.constant 0 : i32
    %90 = vector.broadcast %c0_i32_3 : i32 to vector<16x128xi32>
    %91 = arith.cmpi ne, %89, %90 : vector<16x128xi32>
    %c0_i32_4 = arith.constant 0 : i32
    %92 = vector.broadcast %c0_i32_4 : i32 to vector<16x128xi32>
    %93 = arith.cmpi slt, %89, %92 : vector<16x128xi32>
    %c0_i32_5 = arith.constant 0 : i32
    %94 = arith.cmpi slt, %87, %c0_i32_5 : i32
    %95 = vector.broadcast %94 : i1 to vector<16x128xi1>
    %96 = vector.broadcast %95 : vector<16x128xi1> to vector<16x128xi1>
    %97 = arith.xori %93, %96 : vector<16x128xi1>
    %98 = arith.andi %97, %91 : vector<16x128xi1>
    %99 = vector.broadcast %87 : i32 to vector<16x128xi32>
    %100 = arith.addi %89, %99 : vector<16x128xi32>
    %101 = arith.select %98, %100, %89 : vector<16x128xi1>, vector<16x128xi32>
    %c1_i32_6 = arith.constant 1 : i32
    %102 = vector.broadcast %c1_i32_6 : i32 to vector<16x128xi32>
    %103 = arith.cmpi sge, %84, %102 : vector<16x128xi32>
    %c14_i32 = arith.constant 14 : i32
    %104 = vector.broadcast %c14_i32 : i32 to vector<16x128xi32>
    %105 = arith.cmpi sle, %84, %104 : vector<16x128xi32>
    %c1_i32_7 = arith.constant 1 : i32
    %106 = vector.broadcast %c1_i32_7 : i32 to vector<16x128xi32>
    %107 = arith.cmpi sge, %101, %106 : vector<16x128xi32>
    %c14_i32_8 = arith.constant 14 : i32
    %108 = vector.broadcast %c14_i32_8 : i32 to vector<16x128xi32>
    %109 = arith.cmpi sle, %101, %108 : vector<16x128xi32>
    %c1_i32_9 = arith.constant 1 : i32
    %110 = vector.broadcast %c1_i32_9 : i32 to vector<16x128xi32>
    %111 = arith.cmpi sge, %84, %110 : vector<16x128xi32>
    %112 = arith.extui %111 : vector<16x128xi1> to vector<16x128xi32>
    %113 = arith.sitofp %112 : vector<16x128xi32> to vector<16x128xf32>
    %cst = arith.constant 1.000000e+00 : f32
    %114 = vector.broadcast %cst : f32 to vector<16x128xf32>
    %115 = arith.addf %114, %113 : vector<16x128xf32>
    %c14_i32_10 = arith.constant 14 : i32
    %116 = vector.broadcast %c14_i32_10 : i32 to vector<16x128xi32>
    %117 = arith.cmpi sle, %84, %116 : vector<16x128xi32>
    %118 = arith.extui %117 : vector<16x128xi1> to vector<16x128xi32>
    %119 = arith.sitofp %118 : vector<16x128xi32> to vector<16x128xf32>
    %120 = arith.addf %115, %119 : vector<16x128xf32>
    %c1_i32_11 = arith.constant 1 : i32
    %121 = vector.broadcast %c1_i32_11 : i32 to vector<16x128xi32>
    %122 = arith.cmpi sge, %101, %121 : vector<16x128xi32>
    %123 = arith.extui %122 : vector<16x128xi1> to vector<16x128xi32>
    %124 = arith.sitofp %123 : vector<16x128xi32> to vector<16x128xf32>
    %cst_12 = arith.constant 1.000000e+00 : f32
    %125 = vector.broadcast %cst_12 : f32 to vector<16x128xf32>
    %126 = arith.addf %125, %124 : vector<16x128xf32>
    %c14_i32_13 = arith.constant 14 : i32
    %127 = vector.broadcast %c14_i32_13 : i32 to vector<16x128xi32>
    %128 = arith.cmpi sle, %101, %127 : vector<16x128xi32>
    %129 = arith.extui %128 : vector<16x128xi1> to vector<16x128xi32>
    %130 = arith.sitofp %129 : vector<16x128xi32> to vector<16x128xf32>
    %131 = arith.addf %126, %130 : vector<16x128xf32>
    %132 = arith.mulf %120, %131 : vector<16x128xf32>
    %cst_14 = arith.constant 1.000000e+00 : f32
    %133 = vector.broadcast %cst_14 : f32 to vector<16x128xf32>
    %134 = arith.divf %133, %132 : vector<16x128xf32>
    %c0_15 = arith.constant 0 : index
    %c0_16 = arith.constant 0 : index
    %c0_17 = arith.constant 0 : index
    %135 = vector.load %arg1[%c0_15, %c0_16, %c0_17] : memref<3x16x128xf32, #tpu.memory_space<vmem>>, vector<3x16x128xf32>
    %c1_i32_18 = arith.constant 1 : i32
    %136 = tpu.dynamic_rotate %135 by %c1_i32_18 dim 1 : vector<3x16x128xf32>, i32 -> vector<3x16x128xf32>
    %c15_i32 = arith.constant 15 : i32
    %137 = tpu.dynamic_rotate %135 by %c15_i32 dim 1 : vector<3x16x128xf32>, i32 -> vector<3x16x128xf32>
    %cst_19 = arith.constant 0.000000e+00 : f32
    %138 = vector.broadcast %cst_19 : f32 to vector<16x128xf32>
    %139 = vector.broadcast %81 : f32 to vector<16x128xf32>
    %140 = arith.addf %138, %139 : vector<16x128xf32>
    %cst_20 = arith.constant 0.000000e+00 : f32
    %141 = vector.broadcast %cst_20 : f32 to vector<16x128xf32>
    %142 = vector.broadcast %82 : f32 to vector<16x128xf32>
    %143 = arith.addf %141, %142 : vector<16x128xf32>
    %cst_21 = arith.constant 0.000000e+00 : f32
    %144 = vector.broadcast %cst_21 : f32 to vector<16x128xf32>
    %145 = vector.broadcast %83 : f32 to vector<16x128xf32>
    %146 = arith.addf %144, %145 : vector<16x128xf32>
    %c1_i32_22 = arith.constant 1 : i32
    %147 = tpu.dynamic_rotate %136 by %c1_i32_22 dim 2 : vector<3x16x128xf32>, i32 -> vector<3x16x128xf32>
    %148 = arith.andi %103, %107 : vector<16x128xi1>
    %cst_23 = arith.constant 0.000000e+00 : f32
    %149 = vector.shape_cast %148 : vector<16x128xi1> to vector<1x16x128xi1>
    %150 = vector.broadcast %149 : vector<1x16x128xi1> to vector<3x16x128xi1>
    %151 = vector.broadcast %cst_23 : f32 to vector<3x16x128xf32>
    %152 = arith.select %150, %147, %151 : vector<3x16x128xi1>, vector<3x16x128xf32>
    %153 = vector.extract_strided_slice %152 {offsets = [0, 0, 0], sizes = [1, 16, 128], strides = [1, 1, 1]} : vector<3x16x128xf32> to vector<1x16x128xf32>
    %154 = vector.shape_cast %153 : vector<1x16x128xf32> to vector<16x128xf32>
    %155 = vector.broadcast %0 : f32 to vector<16x128xf32>
    %156 = arith.mulf %155, %154 : vector<16x128xf32>
    %157 = arith.addf %140, %156 : vector<16x128xf32>
    %158 = vector.extract_strided_slice %152 {offsets = [1, 0, 0], sizes = [1, 16, 128], strides = [1, 1, 1]} : vector<3x16x128xf32> to vector<1x16x128xf32>
    %159 = vector.shape_cast %158 : vector<1x16x128xf32> to vector<16x128xf32>
    %160 = vector.broadcast %9 : f32 to vector<16x128xf32>
    %161 = arith.mulf %160, %159 : vector<16x128xf32>
    %162 = arith.addf %157, %161 : vector<16x128xf32>
    %163 = vector.extract_strided_slice %152 {offsets = [2, 0, 0], sizes = [1, 16, 128], strides = [1, 1, 1]} : vector<3x16x128xf32> to vector<1x16x128xf32>
    %164 = vector.shape_cast %163 : vector<1x16x128xf32> to vector<16x128xf32>
    %165 = vector.broadcast %18 : f32 to vector<16x128xf32>
    %166 = arith.mulf %165, %164 : vector<16x128xf32>
    %167 = arith.addf %162, %166 : vector<16x128xf32>
    %168 = vector.extract_strided_slice %152 {offsets = [0, 0, 0], sizes = [1, 16, 128], strides = [1, 1, 1]} : vector<3x16x128xf32> to vector<1x16x128xf32>
    %169 = vector.shape_cast %168 : vector<1x16x128xf32> to vector<16x128xf32>
    %170 = vector.broadcast %27 : f32 to vector<16x128xf32>
    %171 = arith.mulf %170, %169 : vector<16x128xf32>
    %172 = arith.addf %143, %171 : vector<16x128xf32>
    %173 = vector.extract_strided_slice %152 {offsets = [1, 0, 0], sizes = [1, 16, 128], strides = [1, 1, 1]} : vector<3x16x128xf32> to vector<1x16x128xf32>
    %174 = vector.shape_cast %173 : vector<1x16x128xf32> to vector<16x128xf32>
    %175 = vector.broadcast %36 : f32 to vector<16x128xf32>
    %176 = arith.mulf %175, %174 : vector<16x128xf32>
    %177 = arith.addf %172, %176 : vector<16x128xf32>
    %178 = vector.extract_strided_slice %152 {offsets = [2, 0, 0], sizes = [1, 16, 128], strides = [1, 1, 1]} : vector<3x16x128xf32> to vector<1x16x128xf32>
    %179 = vector.shape_cast %178 : vector<1x16x128xf32> to vector<16x128xf32>
    %180 = vector.broadcast %45 : f32 to vector<16x128xf32>
    %181 = arith.mulf %180, %179 : vector<16x128xf32>
    %182 = arith.addf %177, %181 : vector<16x128xf32>
    %183 = vector.extract_strided_slice %152 {offsets = [0, 0, 0], sizes = [1, 16, 128], strides = [1, 1, 1]} : vector<3x16x128xf32> to vector<1x16x128xf32>
    %184 = vector.shape_cast %183 : vector<1x16x128xf32> to vector<16x128xf32>
    %185 = vector.broadcast %54 : f32 to vector<16x128xf32>
    %186 = arith.mulf %185, %184 : vector<16x128xf32>
    %187 = arith.addf %146, %186 : vector<16x128xf32>
    %188 = vector.extract_strided_slice %152 {offsets = [1, 0, 0], sizes = [1, 16, 128], strides = [1, 1, 1]} : vector<3x16x128xf32> to vector<1x16x128xf32>
    %189 = vector.shape_cast %188 : vector<1x16x128xf32> to vector<16x128xf32>
    %190 = vector.broadcast %63 : f32 to vector<16x128xf32>
    %191 = arith.mulf %190, %189 : vector<16x128xf32>
    %192 = arith.addf %187, %191 : vector<16x128xf32>
    %193 = vector.extract_strided_slice %152 {offsets = [2, 0, 0], sizes = [1, 16, 128], strides = [1, 1, 1]} : vector<3x16x128xf32> to vector<1x16x128xf32>
    %194 = vector.shape_cast %193 : vector<1x16x128xf32> to vector<16x128xf32>
    %195 = vector.broadcast %72 : f32 to vector<16x128xf32>
    %196 = arith.mulf %195, %194 : vector<16x128xf32>
    %197 = arith.addf %192, %196 : vector<16x128xf32>
    %cst_24 = arith.constant 0.000000e+00 : f32
    %198 = vector.shape_cast %103 : vector<16x128xi1> to vector<1x16x128xi1>
    %199 = vector.broadcast %198 : vector<1x16x128xi1> to vector<3x16x128xi1>
    %200 = vector.broadcast %cst_24 : f32 to vector<3x16x128xf32>
    %201 = arith.select %199, %136, %200 : vector<3x16x128xi1>, vector<3x16x128xf32>
    %202 = arith.addf %152, %201 : vector<3x16x128xf32>
    %203 = vector.extract_strided_slice %201 {offsets = [0, 0, 0], sizes = [1, 16, 128], strides = [1, 1, 1]} : vector<3x16x128xf32> to vector<1x16x128xf32>
    %204 = vector.shape_cast %203 : vector<1x16x128xf32> to vector<16x128xf32>
    %205 = vector.broadcast %1 : f32 to vector<16x128xf32>
    %206 = arith.mulf %205, %204 : vector<16x128xf32>
    %207 = arith.addf %167, %206 : vector<16x128xf32>
    %208 = vector.extract_strided_slice %201 {offsets = [1, 0, 0], sizes = [1, 16, 128], strides = [1, 1, 1]} : vector<3x16x128xf32> to vector<1x16x128xf32>
    %209 = vector.shape_cast %208 : vector<1x16x128xf32> to vector<16x128xf32>
    %210 = vector.broadcast %10 : f32 to vector<16x128xf32>
    %211 = arith.mulf %210, %209 : vector<16x128xf32>
    %212 = arith.addf %207, %211 : vector<16x128xf32>
    %213 = vector.extract_strided_slice %201 {offsets = [2, 0, 0], sizes = [1, 16, 128], strides = [1, 1, 1]} : vector<3x16x128xf32> to vector<1x16x128xf32>
    %214 = vector.shape_cast %213 : vector<1x16x128xf32> to vector<16x128xf32>
    %215 = vector.broadcast %19 : f32 to vector<16x128xf32>
    %216 = arith.mulf %215, %214 : vector<16x128xf32>
    %217 = arith.addf %212, %216 : vector<16x128xf32>
    %218 = vector.extract_strided_slice %201 {offsets = [0, 0, 0], sizes = [1, 16, 128], strides = [1, 1, 1]} : vector<3x16x128xf32> to vector<1x16x128xf32>
    %219 = vector.shape_cast %218 : vector<1x16x128xf32> to vector<16x128xf32>
    %220 = vector.broadcast %28 : f32 to vector<16x128xf32>
    %221 = arith.mulf %220, %219 : vector<16x128xf32>
    %222 = arith.addf %182, %221 : vector<16x128xf32>
    %223 = vector.extract_strided_slice %201 {offsets = [1, 0, 0], sizes = [1, 16, 128], strides = [1, 1, 1]} : vector<3x16x128xf32> to vector<1x16x128xf32>
    %224 = vector.shape_cast %223 : vector<1x16x128xf32> to vector<16x128xf32>
    %225 = vector.broadcast %37 : f32 to vector<16x128xf32>
    %226 = arith.mulf %225, %224 : vector<16x128xf32>
    %227 = arith.addf %222, %226 : vector<16x128xf32>
    %228 = vector.extract_strided_slice %201 {offsets = [2, 0, 0], sizes = [1, 16, 128], strides = [1, 1, 1]} : vector<3x16x128xf32> to vector<1x16x128xf32>
    %229 = vector.shape_cast %228 : vector<1x16x128xf32> to vector<16x128xf32>
    %230 = vector.broadcast %46 : f32 to vector<16x128xf32>
    %231 = arith.mulf %230, %229 : vector<16x128xf32>
    %232 = arith.addf %227, %231 : vector<16x128xf32>
    %233 = vector.extract_strided_slice %201 {offsets = [0, 0, 0], sizes = [1, 16, 128], strides = [1, 1, 1]} : vector<3x16x128xf32> to vector<1x16x128xf32>
    %234 = vector.shape_cast %233 : vector<1x16x128xf32> to vector<16x128xf32>
    %235 = vector.broadcast %55 : f32 to vector<16x128xf32>
    %236 = arith.mulf %235, %234 : vector<16x128xf32>
    %237 = arith.addf %197, %236 : vector<16x128xf32>
    %238 = vector.extract_strided_slice %201 {offsets = [1, 0, 0], sizes = [1, 16, 128], strides = [1, 1, 1]} : vector<3x16x128xf32> to vector<1x16x128xf32>
    %239 = vector.shape_cast %238 : vector<1x16x128xf32> to vector<16x128xf32>
    %240 = vector.broadcast %64 : f32 to vector<16x128xf32>
    %241 = arith.mulf %240, %239 : vector<16x128xf32>
    %242 = arith.addf %237, %241 : vector<16x128xf32>
    %243 = vector.extract_strided_slice %201 {offsets = [2, 0, 0], sizes = [1, 16, 128], strides = [1, 1, 1]} : vector<3x16x128xf32> to vector<1x16x128xf32>
    %244 = vector.shape_cast %243 : vector<1x16x128xf32> to vector<16x128xf32>
    %245 = vector.broadcast %73 : f32 to vector<16x128xf32>
    %246 = arith.mulf %245, %244 : vector<16x128xf32>
    %247 = arith.addf %242, %246 : vector<16x128xf32>
    %c127_i32 = arith.constant 127 : i32
    %248 = tpu.dynamic_rotate %136 by %c127_i32 dim 2 : vector<3x16x128xf32>, i32 -> vector<3x16x128xf32>
    %249 = arith.andi %103, %109 : vector<16x128xi1>
    %cst_25 = arith.constant 0.000000e+00 : f32
    %250 = vector.shape_cast %249 : vector<16x128xi1> to vector<1x16x128xi1>
    %251 = vector.broadcast %250 : vector<1x16x128xi1> to vector<3x16x128xi1>
    %252 = vector.broadcast %cst_25 : f32 to vector<3x16x128xf32>
    %253 = arith.select %251, %248, %252 : vector<3x16x128xi1>, vector<3x16x128xf32>
    %254 = arith.addf %202, %253 : vector<3x16x128xf32>
    %255 = vector.extract_strided_slice %253 {offsets = [0, 0, 0], sizes = [1, 16, 128], strides = [1, 1, 1]} : vector<3x16x128xf32> to vector<1x16x128xf32>
    %256 = vector.shape_cast %255 : vector<1x16x128xf32> to vector<16x128xf32>
    %257 = vector.broadcast %2 : f32 to vector<16x128xf32>
    %258 = arith.mulf %257, %256 : vector<16x128xf32>
    %259 = arith.addf %217, %258 : vector<16x128xf32>
    %260 = vector.extract_strided_slice %253 {offsets = [1, 0, 0], sizes = [1, 16, 128], strides = [1, 1, 1]} : vector<3x16x128xf32> to vector<1x16x128xf32>
    %261 = vector.shape_cast %260 : vector<1x16x128xf32> to vector<16x128xf32>
    %262 = vector.broadcast %11 : f32 to vector<16x128xf32>
    %263 = arith.mulf %262, %261 : vector<16x128xf32>
    %264 = arith.addf %259, %263 : vector<16x128xf32>
    %265 = vector.extract_strided_slice %253 {offsets = [2, 0, 0], sizes = [1, 16, 128], strides = [1, 1, 1]} : vector<3x16x128xf32> to vector<1x16x128xf32>
    %266 = vector.shape_cast %265 : vector<1x16x128xf32> to vector<16x128xf32>
    %267 = vector.broadcast %20 : f32 to vector<16x128xf32>
    %268 = arith.mulf %267, %266 : vector<16x128xf32>
    %269 = arith.addf %264, %268 : vector<16x128xf32>
    %270 = vector.extract_strided_slice %253 {offsets = [0, 0, 0], sizes = [1, 16, 128], strides = [1, 1, 1]} : vector<3x16x128xf32> to vector<1x16x128xf32>
    %271 = vector.shape_cast %270 : vector<1x16x128xf32> to vector<16x128xf32>
    %272 = vector.broadcast %29 : f32 to vector<16x128xf32>
    %273 = arith.mulf %272, %271 : vector<16x128xf32>
    %274 = arith.addf %232, %273 : vector<16x128xf32>
    %275 = vector.extract_strided_slice %253 {offsets = [1, 0, 0], sizes = [1, 16, 128], strides = [1, 1, 1]} : vector<3x16x128xf32> to vector<1x16x128xf32>
    %276 = vector.shape_cast %275 : vector<1x16x128xf32> to vector<16x128xf32>
    %277 = vector.broadcast %38 : f32 to vector<16x128xf32>
    %278 = arith.mulf %277, %276 : vector<16x128xf32>
    %279 = arith.addf %274, %278 : vector<16x128xf32>
    %280 = vector.extract_strided_slice %253 {offsets = [2, 0, 0], sizes = [1, 16, 128], strides = [1, 1, 1]} : vector<3x16x128xf32> to vector<1x16x128xf32>
    %281 = vector.shape_cast %280 : vector<1x16x128xf32> to vector<16x128xf32>
    %282 = vector.broadcast %47 : f32 to vector<16x128xf32>
    %283 = arith.mulf %282, %281 : vector<16x128xf32>
    %284 = arith.addf %279, %283 : vector<16x128xf32>
    %285 = vector.extract_strided_slice %253 {offsets = [0, 0, 0], sizes = [1, 16, 128], strides = [1, 1, 1]} : vector<3x16x128xf32> to vector<1x16x128xf32>
    %286 = vector.shape_cast %285 : vector<1x16x128xf32> to vector<16x128xf32>
    %287 = vector.broadcast %56 : f32 to vector<16x128xf32>
    %288 = arith.mulf %287, %286 : vector<16x128xf32>
    %289 = arith.addf %247, %288 : vector<16x128xf32>
    %290 = vector.extract_strided_slice %253 {offsets = [1, 0, 0], sizes = [1, 16, 128], strides = [1, 1, 1]} : vector<3x16x128xf32> to vector<1x16x128xf32>
    %291 = vector.shape_cast %290 : vector<1x16x128xf32> to vector<16x128xf32>
    %292 = vector.broadcast %65 : f32 to vector<16x128xf32>
    %293 = arith.mulf %292, %291 : vector<16x128xf32>
    %294 = arith.addf %289, %293 : vector<16x128xf32>
    %295 = vector.extract_strided_slice %253 {offsets = [2, 0, 0], sizes = [1, 16, 128], strides = [1, 1, 1]} : vector<3x16x128xf32> to vector<1x16x128xf32>
    %296 = vector.shape_cast %295 : vector<1x16x128xf32> to vector<16x128xf32>
    %297 = vector.broadcast %74 : f32 to vector<16x128xf32>
    %298 = arith.mulf %297, %296 : vector<16x128xf32>
    %299 = arith.addf %294, %298 : vector<16x128xf32>
    %c1_i32_26 = arith.constant 1 : i32
    %300 = tpu.dynamic_rotate %135 by %c1_i32_26 dim 2 : vector<3x16x128xf32>, i32 -> vector<3x16x128xf32>
    %cst_27 = arith.constant 0.000000e+00 : f32
    %301 = vector.shape_cast %107 : vector<16x128xi1> to vector<1x16x128xi1>
    %302 = vector.broadcast %301 : vector<1x16x128xi1> to vector<3x16x128xi1>
    %303 = vector.broadcast %cst_27 : f32 to vector<3x16x128xf32>
    %304 = arith.select %302, %300, %303 : vector<3x16x128xi1>, vector<3x16x128xf32>
    %305 = arith.addf %254, %304 : vector<3x16x128xf32>
    %306 = vector.extract_strided_slice %304 {offsets = [0, 0, 0], sizes = [1, 16, 128], strides = [1, 1, 1]} : vector<3x16x128xf32> to vector<1x16x128xf32>
    %307 = vector.shape_cast %306 : vector<1x16x128xf32> to vector<16x128xf32>
    %308 = vector.broadcast %3 : f32 to vector<16x128xf32>
    %309 = arith.mulf %308, %307 : vector<16x128xf32>
    %310 = arith.addf %269, %309 : vector<16x128xf32>
    %311 = vector.extract_strided_slice %304 {offsets = [1, 0, 0], sizes = [1, 16, 128], strides = [1, 1, 1]} : vector<3x16x128xf32> to vector<1x16x128xf32>
    %312 = vector.shape_cast %311 : vector<1x16x128xf32> to vector<16x128xf32>
    %313 = vector.broadcast %12 : f32 to vector<16x128xf32>
    %314 = arith.mulf %313, %312 : vector<16x128xf32>
    %315 = arith.addf %310, %314 : vector<16x128xf32>
    %316 = vector.extract_strided_slice %304 {offsets = [2, 0, 0], sizes = [1, 16, 128], strides = [1, 1, 1]} : vector<3x16x128xf32> to vector<1x16x128xf32>
    %317 = vector.shape_cast %316 : vector<1x16x128xf32> to vector<16x128xf32>
    %318 = vector.broadcast %21 : f32 to vector<16x128xf32>
    %319 = arith.mulf %318, %317 : vector<16x128xf32>
    %320 = arith.addf %315, %319 : vector<16x128xf32>
    %321 = vector.extract_strided_slice %304 {offsets = [0, 0, 0], sizes = [1, 16, 128], strides = [1, 1, 1]} : vector<3x16x128xf32> to vector<1x16x128xf32>
    %322 = vector.shape_cast %321 : vector<1x16x128xf32> to vector<16x128xf32>
    %323 = vector.broadcast %30 : f32 to vector<16x128xf32>
    %324 = arith.mulf %323, %322 : vector<16x128xf32>
    %325 = arith.addf %284, %324 : vector<16x128xf32>
    %326 = vector.extract_strided_slice %304 {offsets = [1, 0, 0], sizes = [1, 16, 128], strides = [1, 1, 1]} : vector<3x16x128xf32> to vector<1x16x128xf32>
    %327 = vector.shape_cast %326 : vector<1x16x128xf32> to vector<16x128xf32>
    %328 = vector.broadcast %39 : f32 to vector<16x128xf32>
    %329 = arith.mulf %328, %327 : vector<16x128xf32>
    %330 = arith.addf %325, %329 : vector<16x128xf32>
    %331 = vector.extract_strided_slice %304 {offsets = [2, 0, 0], sizes = [1, 16, 128], strides = [1, 1, 1]} : vector<3x16x128xf32> to vector<1x16x128xf32>
    %332 = vector.shape_cast %331 : vector<1x16x128xf32> to vector<16x128xf32>
    %333 = vector.broadcast %48 : f32 to vector<16x128xf32>
    %334 = arith.mulf %333, %332 : vector<16x128xf32>
    %335 = arith.addf %330, %334 : vector<16x128xf32>
    %336 = vector.extract_strided_slice %304 {offsets = [0, 0, 0], sizes = [1, 16, 128], strides = [1, 1, 1]} : vector<3x16x128xf32> to vector<1x16x128xf32>
    %337 = vector.shape_cast %336 : vector<1x16x128xf32> to vector<16x128xf32>
    %338 = vector.broadcast %57 : f32 to vector<16x128xf32>
    %339 = arith.mulf %338, %337 : vector<16x128xf32>
    %340 = arith.addf %299, %339 : vector<16x128xf32>
    %341 = vector.extract_strided_slice %304 {offsets = [1, 0, 0], sizes = [1, 16, 128], strides = [1, 1, 1]} : vector<3x16x128xf32> to vector<1x16x128xf32>
    %342 = vector.shape_cast %341 : vector<1x16x128xf32> to vector<16x128xf32>
    %343 = vector.broadcast %66 : f32 to vector<16x128xf32>
    %344 = arith.mulf %343, %342 : vector<16x128xf32>
    %345 = arith.addf %340, %344 : vector<16x128xf32>
    %346 = vector.extract_strided_slice %304 {offsets = [2, 0, 0], sizes = [1, 16, 128], strides = [1, 1, 1]} : vector<3x16x128xf32> to vector<1x16x128xf32>
    %347 = vector.shape_cast %346 : vector<1x16x128xf32> to vector<16x128xf32>
    %348 = vector.broadcast %75 : f32 to vector<16x128xf32>
    %349 = arith.mulf %348, %347 : vector<16x128xf32>
    %350 = arith.addf %345, %349 : vector<16x128xf32>
    %351 = arith.addf %305, %135 : vector<3x16x128xf32>
    %352 = vector.extract_strided_slice %135 {offsets = [0, 0, 0], sizes = [1, 16, 128], strides = [1, 1, 1]} : vector<3x16x128xf32> to vector<1x16x128xf32>
    %353 = vector.shape_cast %352 : vector<1x16x128xf32> to vector<16x128xf32>
    %354 = vector.broadcast %4 : f32 to vector<16x128xf32>
    %355 = arith.mulf %354, %353 : vector<16x128xf32>
    %356 = arith.addf %320, %355 : vector<16x128xf32>
    %357 = vector.extract_strided_slice %135 {offsets = [1, 0, 0], sizes = [1, 16, 128], strides = [1, 1, 1]} : vector<3x16x128xf32> to vector<1x16x128xf32>
    %358 = vector.shape_cast %357 : vector<1x16x128xf32> to vector<16x128xf32>
    %359 = vector.broadcast %13 : f32 to vector<16x128xf32>
    %360 = arith.mulf %359, %358 : vector<16x128xf32>
    %361 = arith.addf %356, %360 : vector<16x128xf32>
    %362 = vector.extract_strided_slice %135 {offsets = [2, 0, 0], sizes = [1, 16, 128], strides = [1, 1, 1]} : vector<3x16x128xf32> to vector<1x16x128xf32>
    %363 = vector.shape_cast %362 : vector<1x16x128xf32> to vector<16x128xf32>
    %364 = vector.broadcast %22 : f32 to vector<16x128xf32>
    %365 = arith.mulf %364, %363 : vector<16x128xf32>
    %366 = arith.addf %361, %365 : vector<16x128xf32>
    %367 = vector.extract_strided_slice %135 {offsets = [0, 0, 0], sizes = [1, 16, 128], strides = [1, 1, 1]} : vector<3x16x128xf32> to vector<1x16x128xf32>
    %368 = vector.shape_cast %367 : vector<1x16x128xf32> to vector<16x128xf32>
    %369 = vector.broadcast %31 : f32 to vector<16x128xf32>
    %370 = arith.mulf %369, %368 : vector<16x128xf32>
    %371 = arith.addf %335, %370 : vector<16x128xf32>
    %372 = vector.extract_strided_slice %135 {offsets = [1, 0, 0], sizes = [1, 16, 128], strides = [1, 1, 1]} : vector<3x16x128xf32> to vector<1x16x128xf32>
    %373 = vector.shape_cast %372 : vector<1x16x128xf32> to vector<16x128xf32>
    %374 = vector.broadcast %40 : f32 to vector<16x128xf32>
    %375 = arith.mulf %374, %373 : vector<16x128xf32>
    %376 = arith.addf %371, %375 : vector<16x128xf32>
    %377 = vector.extract_strided_slice %135 {offsets = [2, 0, 0], sizes = [1, 16, 128], strides = [1, 1, 1]} : vector<3x16x128xf32> to vector<1x16x128xf32>
    %378 = vector.shape_cast %377 : vector<1x16x128xf32> to vector<16x128xf32>
    %379 = vector.broadcast %49 : f32 to vector<16x128xf32>
    %380 = arith.mulf %379, %378 : vector<16x128xf32>
    %381 = arith.addf %376, %380 : vector<16x128xf32>
    %382 = vector.extract_strided_slice %135 {offsets = [0, 0, 0], sizes = [1, 16, 128], strides = [1, 1, 1]} : vector<3x16x128xf32> to vector<1x16x128xf32>
    %383 = vector.shape_cast %382 : vector<1x16x128xf32> to vector<16x128xf32>
    %384 = vector.broadcast %58 : f32 to vector<16x128xf32>
    %385 = arith.mulf %384, %383 : vector<16x128xf32>
    %386 = arith.addf %350, %385 : vector<16x128xf32>
    %387 = vector.extract_strided_slice %135 {offsets = [1, 0, 0], sizes = [1, 16, 128], strides = [1, 1, 1]} : vector<3x16x128xf32> to vector<1x16x128xf32>
    %388 = vector.shape_cast %387 : vector<1x16x128xf32> to vector<16x128xf32>
    %389 = vector.broadcast %67 : f32 to vector<16x128xf32>
    %390 = arith.mulf %389, %388 : vector<16x128xf32>
    %391 = arith.addf %386, %390 : vector<16x128xf32>
    %392 = vector.extract_strided_slice %135 {offsets = [2, 0, 0], sizes = [1, 16, 128], strides = [1, 1, 1]} : vector<3x16x128xf32> to vector<1x16x128xf32>
    %393 = vector.shape_cast %392 : vector<1x16x128xf32> to vector<16x128xf32>
    %394 = vector.broadcast %76 : f32 to vector<16x128xf32>
    %395 = arith.mulf %394, %393 : vector<16x128xf32>
    %396 = arith.addf %391, %395 : vector<16x128xf32>
    %c127_i32_28 = arith.constant 127 : i32
    %397 = tpu.dynamic_rotate %135 by %c127_i32_28 dim 2 : vector<3x16x128xf32>, i32 -> vector<3x16x128xf32>
    %cst_29 = arith.constant 0.000000e+00 : f32
    %398 = vector.shape_cast %109 : vector<16x128xi1> to vector<1x16x128xi1>
    %399 = vector.broadcast %398 : vector<1x16x128xi1> to vector<3x16x128xi1>
    %400 = vector.broadcast %cst_29 : f32 to vector<3x16x128xf32>
    %401 = arith.select %399, %397, %400 : vector<3x16x128xi1>, vector<3x16x128xf32>
    %402 = arith.addf %351, %401 : vector<3x16x128xf32>
    %403 = vector.extract_strided_slice %401 {offsets = [0, 0, 0], sizes = [1, 16, 128], strides = [1, 1, 1]} : vector<3x16x128xf32> to vector<1x16x128xf32>
    %404 = vector.shape_cast %403 : vector<1x16x128xf32> to vector<16x128xf32>
    %405 = vector.broadcast %5 : f32 to vector<16x128xf32>
    %406 = arith.mulf %405, %404 : vector<16x128xf32>
    %407 = arith.addf %366, %406 : vector<16x128xf32>
    %408 = vector.extract_strided_slice %401 {offsets = [1, 0, 0], sizes = [1, 16, 128], strides = [1, 1, 1]} : vector<3x16x128xf32> to vector<1x16x128xf32>
    %409 = vector.shape_cast %408 : vector<1x16x128xf32> to vector<16x128xf32>
    %410 = vector.broadcast %14 : f32 to vector<16x128xf32>
    %411 = arith.mulf %410, %409 : vector<16x128xf32>
    %412 = arith.addf %407, %411 : vector<16x128xf32>
    %413 = vector.extract_strided_slice %401 {offsets = [2, 0, 0], sizes = [1, 16, 128], strides = [1, 1, 1]} : vector<3x16x128xf32> to vector<1x16x128xf32>
    %414 = vector.shape_cast %413 : vector<1x16x128xf32> to vector<16x128xf32>
    %415 = vector.broadcast %23 : f32 to vector<16x128xf32>
    %416 = arith.mulf %415, %414 : vector<16x128xf32>
    %417 = arith.addf %412, %416 : vector<16x128xf32>
    %418 = vector.extract_strided_slice %401 {offsets = [0, 0, 0], sizes = [1, 16, 128], strides = [1, 1, 1]} : vector<3x16x128xf32> to vector<1x16x128xf32>
    %419 = vector.shape_cast %418 : vector<1x16x128xf32> to vector<16x128xf32>
    %420 = vector.broadcast %32 : f32 to vector<16x128xf32>
    %421 = arith.mulf %420, %419 : vector<16x128xf32>
    %422 = arith.addf %381, %421 : vector<16x128xf32>
    %423 = vector.extract_strided_slice %401 {offsets = [1, 0, 0], sizes = [1, 16, 128], strides = [1, 1, 1]} : vector<3x16x128xf32> to vector<1x16x128xf32>
    %424 = vector.shape_cast %423 : vector<1x16x128xf32> to vector<16x128xf32>
    %425 = vector.broadcast %41 : f32 to vector<16x128xf32>
    %426 = arith.mulf %425, %424 : vector<16x128xf32>
    %427 = arith.addf %422, %426 : vector<16x128xf32>
    %428 = vector.extract_strided_slice %401 {offsets = [2, 0, 0], sizes = [1, 16, 128], strides = [1, 1, 1]} : vector<3x16x128xf32> to vector<1x16x128xf32>
    %429 = vector.shape_cast %428 : vector<1x16x128xf32> to vector<16x128xf32>
    %430 = vector.broadcast %50 : f32 to vector<16x128xf32>
    %431 = arith.mulf %430, %429 : vector<16x128xf32>
    %432 = arith.addf %427, %431 : vector<16x128xf32>
    %433 = vector.extract_strided_slice %401 {offsets = [0, 0, 0], sizes = [1, 16, 128], strides = [1, 1, 1]} : vector<3x16x128xf32> to vector<1x16x128xf32>
    %434 = vector.shape_cast %433 : vector<1x16x128xf32> to vector<16x128xf32>
    %435 = vector.broadcast %59 : f32 to vector<16x128xf32>
    %436 = arith.mulf %435, %434 : vector<16x128xf32>
    %437 = arith.addf %396, %436 : vector<16x128xf32>
    %438 = vector.extract_strided_slice %401 {offsets = [1, 0, 0], sizes = [1, 16, 128], strides = [1, 1, 1]} : vector<3x16x128xf32> to vector<1x16x128xf32>
    %439 = vector.shape_cast %438 : vector<1x16x128xf32> to vector<16x128xf32>
    %440 = vector.broadcast %68 : f32 to vector<16x128xf32>
    %441 = arith.mulf %440, %439 : vector<16x128xf32>
    %442 = arith.addf %437, %441 : vector<16x128xf32>
    %443 = vector.extract_strided_slice %401 {offsets = [2, 0, 0], sizes = [1, 16, 128], strides = [1, 1, 1]} : vector<3x16x128xf32> to vector<1x16x128xf32>
    %444 = vector.shape_cast %443 : vector<1x16x128xf32> to vector<16x128xf32>
    %445 = vector.broadcast %77 : f32 to vector<16x128xf32>
    %446 = arith.mulf %445, %444 : vector<16x128xf32>
    %447 = arith.addf %442, %446 : vector<16x128xf32>
    %c1_i32_30 = arith.constant 1 : i32
    %448 = tpu.dynamic_rotate %137 by %c1_i32_30 dim 2 : vector<3x16x128xf32>, i32 -> vector<3x16x128xf32>
    %449 = arith.andi %105, %107 : vector<16x128xi1>
    %cst_31 = arith.constant 0.000000e+00 : f32
    %450 = vector.shape_cast %449 : vector<16x128xi1> to vector<1x16x128xi1>
    %451 = vector.broadcast %450 : vector<1x16x128xi1> to vector<3x16x128xi1>
    %452 = vector.broadcast %cst_31 : f32 to vector<3x16x128xf32>
    %453 = arith.select %451, %448, %452 : vector<3x16x128xi1>, vector<3x16x128xf32>
    %454 = arith.addf %402, %453 : vector<3x16x128xf32>
    %455 = vector.extract_strided_slice %453 {offsets = [0, 0, 0], sizes = [1, 16, 128], strides = [1, 1, 1]} : vector<3x16x128xf32> to vector<1x16x128xf32>
    %456 = vector.shape_cast %455 : vector<1x16x128xf32> to vector<16x128xf32>
    %457 = vector.broadcast %6 : f32 to vector<16x128xf32>
    %458 = arith.mulf %457, %456 : vector<16x128xf32>
    %459 = arith.addf %417, %458 : vector<16x128xf32>
    %460 = vector.extract_strided_slice %453 {offsets = [1, 0, 0], sizes = [1, 16, 128], strides = [1, 1, 1]} : vector<3x16x128xf32> to vector<1x16x128xf32>
    %461 = vector.shape_cast %460 : vector<1x16x128xf32> to vector<16x128xf32>
    %462 = vector.broadcast %15 : f32 to vector<16x128xf32>
    %463 = arith.mulf %462, %461 : vector<16x128xf32>
    %464 = arith.addf %459, %463 : vector<16x128xf32>
    %465 = vector.extract_strided_slice %453 {offsets = [2, 0, 0], sizes = [1, 16, 128], strides = [1, 1, 1]} : vector<3x16x128xf32> to vector<1x16x128xf32>
    %466 = vector.shape_cast %465 : vector<1x16x128xf32> to vector<16x128xf32>
    %467 = vector.broadcast %24 : f32 to vector<16x128xf32>
    %468 = arith.mulf %467, %466 : vector<16x128xf32>
    %469 = arith.addf %464, %468 : vector<16x128xf32>
    %470 = vector.extract_strided_slice %453 {offsets = [0, 0, 0], sizes = [1, 16, 128], strides = [1, 1, 1]} : vector<3x16x128xf32> to vector<1x16x128xf32>
    %471 = vector.shape_cast %470 : vector<1x16x128xf32> to vector<16x128xf32>
    %472 = vector.broadcast %33 : f32 to vector<16x128xf32>
    %473 = arith.mulf %472, %471 : vector<16x128xf32>
    %474 = arith.addf %432, %473 : vector<16x128xf32>
    %475 = vector.extract_strided_slice %453 {offsets = [1, 0, 0], sizes = [1, 16, 128], strides = [1, 1, 1]} : vector<3x16x128xf32> to vector<1x16x128xf32>
    %476 = vector.shape_cast %475 : vector<1x16x128xf32> to vector<16x128xf32>
    %477 = vector.broadcast %42 : f32 to vector<16x128xf32>
    %478 = arith.mulf %477, %476 : vector<16x128xf32>
    %479 = arith.addf %474, %478 : vector<16x128xf32>
    %480 = vector.extract_strided_slice %453 {offsets = [2, 0, 0], sizes = [1, 16, 128], strides = [1, 1, 1]} : vector<3x16x128xf32> to vector<1x16x128xf32>
    %481 = vector.shape_cast %480 : vector<1x16x128xf32> to vector<16x128xf32>
    %482 = vector.broadcast %51 : f32 to vector<16x128xf32>
    %483 = arith.mulf %482, %481 : vector<16x128xf32>
    %484 = arith.addf %479, %483 : vector<16x128xf32>
    %485 = vector.extract_strided_slice %453 {offsets = [0, 0, 0], sizes = [1, 16, 128], strides = [1, 1, 1]} : vector<3x16x128xf32> to vector<1x16x128xf32>
    %486 = vector.shape_cast %485 : vector<1x16x128xf32> to vector<16x128xf32>
    %487 = vector.broadcast %60 : f32 to vector<16x128xf32>
    %488 = arith.mulf %487, %486 : vector<16x128xf32>
    %489 = arith.addf %447, %488 : vector<16x128xf32>
    %490 = vector.extract_strided_slice %453 {offsets = [1, 0, 0], sizes = [1, 16, 128], strides = [1, 1, 1]} : vector<3x16x128xf32> to vector<1x16x128xf32>
    %491 = vector.shape_cast %490 : vector<1x16x128xf32> to vector<16x128xf32>
    %492 = vector.broadcast %69 : f32 to vector<16x128xf32>
    %493 = arith.mulf %492, %491 : vector<16x128xf32>
    %494 = arith.addf %489, %493 : vector<16x128xf32>
    %495 = vector.extract_strided_slice %453 {offsets = [2, 0, 0], sizes = [1, 16, 128], strides = [1, 1, 1]} : vector<3x16x128xf32> to vector<1x16x128xf32>
    %496 = vector.shape_cast %495 : vector<1x16x128xf32> to vector<16x128xf32>
    %497 = vector.broadcast %78 : f32 to vector<16x128xf32>
    %498 = arith.mulf %497, %496 : vector<16x128xf32>
    %499 = arith.addf %494, %498 : vector<16x128xf32>
    %cst_32 = arith.constant 0.000000e+00 : f32
    %500 = vector.shape_cast %105 : vector<16x128xi1> to vector<1x16x128xi1>
    %501 = vector.broadcast %500 : vector<1x16x128xi1> to vector<3x16x128xi1>
    %502 = vector.broadcast %cst_32 : f32 to vector<3x16x128xf32>
    %503 = arith.select %501, %137, %502 : vector<3x16x128xi1>, vector<3x16x128xf32>
    %504 = arith.addf %454, %503 : vector<3x16x128xf32>
    %505 = vector.extract_strided_slice %503 {offsets = [0, 0, 0], sizes = [1, 16, 128], strides = [1, 1, 1]} : vector<3x16x128xf32> to vector<1x16x128xf32>
    %506 = vector.shape_cast %505 : vector<1x16x128xf32> to vector<16x128xf32>
    %507 = vector.broadcast %7 : f32 to vector<16x128xf32>
    %508 = arith.mulf %507, %506 : vector<16x128xf32>
    %509 = arith.addf %469, %508 : vector<16x128xf32>
    %510 = vector.extract_strided_slice %503 {offsets = [1, 0, 0], sizes = [1, 16, 128], strides = [1, 1, 1]} : vector<3x16x128xf32> to vector<1x16x128xf32>
    %511 = vector.shape_cast %510 : vector<1x16x128xf32> to vector<16x128xf32>
    %512 = vector.broadcast %16 : f32 to vector<16x128xf32>
    %513 = arith.mulf %512, %511 : vector<16x128xf32>
    %514 = arith.addf %509, %513 : vector<16x128xf32>
    %515 = vector.extract_strided_slice %503 {offsets = [2, 0, 0], sizes = [1, 16, 128], strides = [1, 1, 1]} : vector<3x16x128xf32> to vector<1x16x128xf32>
    %516 = vector.shape_cast %515 : vector<1x16x128xf32> to vector<16x128xf32>
    %517 = vector.broadcast %25 : f32 to vector<16x128xf32>
    %518 = arith.mulf %517, %516 : vector<16x128xf32>
    %519 = arith.addf %514, %518 : vector<16x128xf32>
    %520 = vector.extract_strided_slice %503 {offsets = [0, 0, 0], sizes = [1, 16, 128], strides = [1, 1, 1]} : vector<3x16x128xf32> to vector<1x16x128xf32>
    %521 = vector.shape_cast %520 : vector<1x16x128xf32> to vector<16x128xf32>
    %522 = vector.broadcast %34 : f32 to vector<16x128xf32>
    %523 = arith.mulf %522, %521 : vector<16x128xf32>
    %524 = arith.addf %484, %523 : vector<16x128xf32>
    %525 = vector.extract_strided_slice %503 {offsets = [1, 0, 0], sizes = [1, 16, 128], strides = [1, 1, 1]} : vector<3x16x128xf32> to vector<1x16x128xf32>
    %526 = vector.shape_cast %525 : vector<1x16x128xf32> to vector<16x128xf32>
    %527 = vector.broadcast %43 : f32 to vector<16x128xf32>
    %528 = arith.mulf %527, %526 : vector<16x128xf32>
    %529 = arith.addf %524, %528 : vector<16x128xf32>
    %530 = vector.extract_strided_slice %503 {offsets = [2, 0, 0], sizes = [1, 16, 128], strides = [1, 1, 1]} : vector<3x16x128xf32> to vector<1x16x128xf32>
    %531 = vector.shape_cast %530 : vector<1x16x128xf32> to vector<16x128xf32>
    %532 = vector.broadcast %52 : f32 to vector<16x128xf32>
    %533 = arith.mulf %532, %531 : vector<16x128xf32>
    %534 = arith.addf %529, %533 : vector<16x128xf32>
    %535 = vector.extract_strided_slice %503 {offsets = [0, 0, 0], sizes = [1, 16, 128], strides = [1, 1, 1]} : vector<3x16x128xf32> to vector<1x16x128xf32>
    %536 = vector.shape_cast %535 : vector<1x16x128xf32> to vector<16x128xf32>
    %537 = vector.broadcast %61 : f32 to vector<16x128xf32>
    %538 = arith.mulf %537, %536 : vector<16x128xf32>
    %539 = arith.addf %499, %538 : vector<16x128xf32>
    %540 = vector.extract_strided_slice %503 {offsets = [1, 0, 0], sizes = [1, 16, 128], strides = [1, 1, 1]} : vector<3x16x128xf32> to vector<1x16x128xf32>
    %541 = vector.shape_cast %540 : vector<1x16x128xf32> to vector<16x128xf32>
    %542 = vector.broadcast %70 : f32 to vector<16x128xf32>
    %543 = arith.mulf %542, %541 : vector<16x128xf32>
    %544 = arith.addf %539, %543 : vector<16x128xf32>
    %545 = vector.extract_strided_slice %503 {offsets = [2, 0, 0], sizes = [1, 16, 128], strides = [1, 1, 1]} : vector<3x16x128xf32> to vector<1x16x128xf32>
    %546 = vector.shape_cast %545 : vector<1x16x128xf32> to vector<16x128xf32>
    %547 = vector.broadcast %79 : f32 to vector<16x128xf32>
    %548 = arith.mulf %547, %546 : vector<16x128xf32>
    %549 = arith.addf %544, %548 : vector<16x128xf32>
    %c127_i32_33 = arith.constant 127 : i32
    %550 = tpu.dynamic_rotate %137 by %c127_i32_33 dim 2 : vector<3x16x128xf32>, i32 -> vector<3x16x128xf32>
    %551 = arith.andi %105, %109 : vector<16x128xi1>
    %cst_34 = arith.constant 0.000000e+00 : f32
    %552 = vector.shape_cast %551 : vector<16x128xi1> to vector<1x16x128xi1>
    %553 = vector.broadcast %552 : vector<1x16x128xi1> to vector<3x16x128xi1>
    %554 = vector.broadcast %cst_34 : f32 to vector<3x16x128xf32>
    %555 = arith.select %553, %550, %554 : vector<3x16x128xi1>, vector<3x16x128xf32>
    %556 = arith.addf %504, %555 : vector<3x16x128xf32>
    %557 = vector.extract_strided_slice %555 {offsets = [0, 0, 0], sizes = [1, 16, 128], strides = [1, 1, 1]} : vector<3x16x128xf32> to vector<1x16x128xf32>
    %558 = vector.shape_cast %557 : vector<1x16x128xf32> to vector<16x128xf32>
    %559 = vector.broadcast %8 : f32 to vector<16x128xf32>
    %560 = arith.mulf %559, %558 : vector<16x128xf32>
    %561 = arith.addf %519, %560 : vector<16x128xf32>
    %562 = vector.extract_strided_slice %555 {offsets = [1, 0, 0], sizes = [1, 16, 128], strides = [1, 1, 1]} : vector<3x16x128xf32> to vector<1x16x128xf32>
    %563 = vector.shape_cast %562 : vector<1x16x128xf32> to vector<16x128xf32>
    %564 = vector.broadcast %17 : f32 to vector<16x128xf32>
    %565 = arith.mulf %564, %563 : vector<16x128xf32>
    %566 = arith.addf %561, %565 : vector<16x128xf32>
    %567 = vector.extract_strided_slice %555 {offsets = [2, 0, 0], sizes = [1, 16, 128], strides = [1, 1, 1]} : vector<3x16x128xf32> to vector<1x16x128xf32>
    %568 = vector.shape_cast %567 : vector<1x16x128xf32> to vector<16x128xf32>
    %569 = vector.broadcast %26 : f32 to vector<16x128xf32>
    %570 = arith.mulf %569, %568 : vector<16x128xf32>
    %571 = arith.addf %566, %570 : vector<16x128xf32>
    %572 = vector.extract_strided_slice %555 {offsets = [0, 0, 0], sizes = [1, 16, 128], strides = [1, 1, 1]} : vector<3x16x128xf32> to vector<1x16x128xf32>
    %573 = vector.shape_cast %572 : vector<1x16x128xf32> to vector<16x128xf32>
    %574 = vector.broadcast %35 : f32 to vector<16x128xf32>
    %575 = arith.mulf %574, %573 : vector<16x128xf32>
    %576 = arith.addf %534, %575 : vector<16x128xf32>
    %577 = vector.extract_strided_slice %555 {offsets = [1, 0, 0], sizes = [1, 16, 128], strides = [1, 1, 1]} : vector<3x16x128xf32> to vector<1x16x128xf32>
    %578 = vector.shape_cast %577 : vector<1x16x128xf32> to vector<16x128xf32>
    %579 = vector.broadcast %44 : f32 to vector<16x128xf32>
    %580 = arith.mulf %579, %578 : vector<16x128xf32>
    %581 = arith.addf %576, %580 : vector<16x128xf32>
    %582 = vector.extract_strided_slice %555 {offsets = [2, 0, 0], sizes = [1, 16, 128], strides = [1, 1, 1]} : vector<3x16x128xf32> to vector<1x16x128xf32>
    %583 = vector.shape_cast %582 : vector<1x16x128xf32> to vector<16x128xf32>
    %584 = vector.broadcast %53 : f32 to vector<16x128xf32>
    %585 = arith.mulf %584, %583 : vector<16x128xf32>
    %586 = arith.addf %581, %585 : vector<16x128xf32>
    %587 = vector.extract_strided_slice %555 {offsets = [0, 0, 0], sizes = [1, 16, 128], strides = [1, 1, 1]} : vector<3x16x128xf32> to vector<1x16x128xf32>
    %588 = vector.shape_cast %587 : vector<1x16x128xf32> to vector<16x128xf32>
    %589 = vector.broadcast %62 : f32 to vector<16x128xf32>
    %590 = arith.mulf %589, %588 : vector<16x128xf32>
    %591 = arith.addf %549, %590 : vector<16x128xf32>
    %592 = vector.extract_strided_slice %555 {offsets = [1, 0, 0], sizes = [1, 16, 128], strides = [1, 1, 1]} : vector<3x16x128xf32> to vector<1x16x128xf32>
    %593 = vector.shape_cast %592 : vector<1x16x128xf32> to vector<16x128xf32>
    %594 = vector.broadcast %71 : f32 to vector<16x128xf32>
    %595 = arith.mulf %594, %593 : vector<16x128xf32>
    %596 = arith.addf %591, %595 : vector<16x128xf32>
    %597 = vector.extract_strided_slice %555 {offsets = [2, 0, 0], sizes = [1, 16, 128], strides = [1, 1, 1]} : vector<3x16x128xf32> to vector<1x16x128xf32>
    %598 = vector.shape_cast %597 : vector<1x16x128xf32> to vector<16x128xf32>
    %599 = vector.broadcast %80 : f32 to vector<16x128xf32>
    %600 = arith.mulf %599, %598 : vector<16x128xf32>
    %601 = arith.addf %596, %600 : vector<16x128xf32>
    %602 = vector.shape_cast %134 : vector<16x128xf32> to vector<1x16x128xf32>
    %603 = vector.broadcast %602 : vector<1x16x128xf32> to vector<3x16x128xf32>
    %604 = arith.mulf %556, %603 : vector<3x16x128xf32>
    %c6_35 = arith.constant 6 : index
    %c0_36 = arith.constant 0 : index
    %c0_37 = arith.constant 0 : index
    %605 = vector.load %arg4[%c6_35, %c0_36, %c0_37] : memref<15x16x128xf32, #tpu.memory_space<vmem>>, vector<3x16x128xf32>
    tpu.vector_store %arg4[%c6_35, %c0_36, %c0_37], %604 {strides = array<i32>} : memref<15x16x128xf32, #tpu.memory_space<vmem>>, vector<3x16x128xf32>,
    %c9_38 = arith.constant 9 : index
    %c0_39 = arith.constant 0 : index
    %c0_40 = arith.constant 0 : index
    %606 = vector.load %arg4[%c9_38, %c0_39, %c0_40] : memref<15x16x128xf32, #tpu.memory_space<vmem>>, vector<3x16x128xf32>
    tpu.vector_store %arg4[%c9_38, %c0_39, %c0_40], %135 {strides = array<i32>} : memref<15x16x128xf32, #tpu.memory_space<vmem>>, vector<3x16x128xf32>,
    %607 = math.tanh %571 : vector<16x128xf32>
    %608 = vector.extract_strided_slice %604 {offsets = [0, 0, 0], sizes = [1, 16, 128], strides = [1, 1, 1]} : vector<3x16x128xf32> to vector<1x16x128xf32>
    %609 = vector.shape_cast %608 : vector<1x16x128xf32> to vector<16x128xf32>
    %610 = arith.addf %607, %609 : vector<16x128xf32>
    %c0_41 = arith.constant 0 : index
    %c0_42 = arith.constant 0 : index
    %c0_43 = arith.constant 0 : index
    %611 = vector.load %arg4[%c0_41, %c0_42, %c0_43] : memref<15x16x128xf32, #tpu.memory_space<vmem>>, vector<1x16x128xf32>
    %612 = vector.shape_cast %611 : vector<1x16x128xf32> to vector<16x128xf32>
    %613 = vector.shape_cast %571 : vector<16x128xf32> to vector<1x16x128xf32>
    tpu.vector_store %arg4[%c0_41, %c0_42, %c0_43], %613 {strides = array<i32>} : memref<15x16x128xf32, #tpu.memory_space<vmem>>, vector<1x16x128xf32>,
    %c3_44 = arith.constant 3 : index
    %c0_45 = arith.constant 0 : index
    %c0_46 = arith.constant 0 : index
    %614 = vector.load %arg4[%c3_44, %c0_45, %c0_46] : memref<15x16x128xf32, #tpu.memory_space<vmem>>, vector<1x16x128xf32>
    %615 = vector.shape_cast %614 : vector<1x16x128xf32> to vector<16x128xf32>
    %616 = vector.shape_cast %610 : vector<16x128xf32> to vector<1x16x128xf32>
    tpu.vector_store %arg4[%c3_44, %c0_45, %c0_46], %616 {strides = array<i32>} : memref<15x16x128xf32, #tpu.memory_space<vmem>>, vector<1x16x128xf32>,
    %cst_47 = arith.constant 0.000000e+00 : f32
    %617 = vector.broadcast %cst_47 : f32 to vector<16x128xf32>
    %618 = arith.maximumf %610, %617 : vector<16x128xf32>
    %c12_48 = arith.constant 12 : index
    %c0_49 = arith.constant 0 : index
    %c0_50 = arith.constant 0 : index
    %619 = vector.load %arg4[%c12_48, %c0_49, %c0_50] : memref<15x16x128xf32, #tpu.memory_space<vmem>>, vector<1x16x128xf32>
    %620 = vector.shape_cast %619 : vector<1x16x128xf32> to vector<16x128xf32>
    %621 = vector.shape_cast %618 : vector<16x128xf32> to vector<1x16x128xf32>
    tpu.vector_store %arg4[%c12_48, %c0_49, %c0_50], %621 {strides = array<i32>} : memref<15x16x128xf32, #tpu.memory_space<vmem>>, vector<1x16x128xf32>,
    %622 = math.tanh %586 : vector<16x128xf32>
    %623 = vector.extract_strided_slice %604 {offsets = [1, 0, 0], sizes = [1, 16, 128], strides = [1, 1, 1]} : vector<3x16x128xf32> to vector<1x16x128xf32>
    %624 = vector.shape_cast %623 : vector<1x16x128xf32> to vector<16x128xf32>
    %625 = arith.addf %622, %624 : vector<16x128xf32>
    %c1_51 = arith.constant 1 : index
    %c0_52 = arith.constant 0 : index
    %c0_53 = arith.constant 0 : index
    %626 = vector.load %arg4[%c1_51, %c0_52, %c0_53] : memref<15x16x128xf32, #tpu.memory_space<vmem>>, vector<1x16x128xf32>
    %627 = vector.shape_cast %626 : vector<1x16x128xf32> to vector<16x128xf32>
    %628 = vector.shape_cast %586 : vector<16x128xf32> to vector<1x16x128xf32>
    tpu.vector_store %arg4[%c1_51, %c0_52, %c0_53], %628 {strides = array<i32>} : memref<15x16x128xf32, #tpu.memory_space<vmem>>, vector<1x16x128xf32>,
    %c4_54 = arith.constant 4 : index
    %c0_55 = arith.constant 0 : index
    %c0_56 = arith.constant 0 : index
    %629 = vector.load %arg4[%c4_54, %c0_55, %c0_56] : memref<15x16x128xf32, #tpu.memory_space<vmem>>, vector<1x16x128xf32>
    %630 = vector.shape_cast %629 : vector<1x16x128xf32> to vector<16x128xf32>
    %631 = vector.shape_cast %625 : vector<16x128xf32> to vector<1x16x128xf32>
    tpu.vector_store %arg4[%c4_54, %c0_55, %c0_56], %631 {strides = array<i32>} : memref<15x16x128xf32, #tpu.memory_space<vmem>>, vector<1x16x128xf32>,
    %cst_57 = arith.constant 0.000000e+00 : f32
    %632 = vector.broadcast %cst_57 : f32 to vector<16x128xf32>
    %633 = arith.maximumf %625, %632 : vector<16x128xf32>
    %c13_58 = arith.constant 13 : index
    %c0_59 = arith.constant 0 : index
    %c0_60 = arith.constant 0 : index
    %634 = vector.load %arg4[%c13_58, %c0_59, %c0_60] : memref<15x16x128xf32, #tpu.memory_space<vmem>>, vector<1x16x128xf32>
    %635 = vector.shape_cast %634 : vector<1x16x128xf32> to vector<16x128xf32>
    %636 = vector.shape_cast %633 : vector<16x128xf32> to vector<1x16x128xf32>
    tpu.vector_store %arg4[%c13_58, %c0_59, %c0_60], %636 {strides = array<i32>} : memref<15x16x128xf32, #tpu.memory_space<vmem>>, vector<1x16x128xf32>,
    %637 = math.tanh %601 : vector<16x128xf32>
    %638 = vector.extract_strided_slice %604 {offsets = [2, 0, 0], sizes = [1, 16, 128], strides = [1, 1, 1]} : vector<3x16x128xf32> to vector<1x16x128xf32>
    %639 = vector.shape_cast %638 : vector<1x16x128xf32> to vector<16x128xf32>
    %640 = arith.addf %637, %639 : vector<16x128xf32>
    %c2_61 = arith.constant 2 : index
    %c0_62 = arith.constant 0 : index
    %c0_63 = arith.constant 0 : index
    %641 = vector.load %arg4[%c2_61, %c0_62, %c0_63] : memref<15x16x128xf32, #tpu.memory_space<vmem>>, vector<1x16x128xf32>
    %642 = vector.shape_cast %641 : vector<1x16x128xf32> to vector<16x128xf32>
    %643 = vector.shape_cast %601 : vector<16x128xf32> to vector<1x16x128xf32>
    tpu.vector_store %arg4[%c2_61, %c0_62, %c0_63], %643 {strides = array<i32>} : memref<15x16x128xf32, #tpu.memory_space<vmem>>, vector<1x16x128xf32>,
    %c5_64 = arith.constant 5 : index
    %c0_65 = arith.constant 0 : index
    %c0_66 = arith.constant 0 : index
    %644 = vector.load %arg4[%c5_64, %c0_65, %c0_66] : memref<15x16x128xf32, #tpu.memory_space<vmem>>, vector<1x16x128xf32>
    %645 = vector.shape_cast %644 : vector<1x16x128xf32> to vector<16x128xf32>
    %646 = vector.shape_cast %640 : vector<16x128xf32> to vector<1x16x128xf32>
    tpu.vector_store %arg4[%c5_64, %c0_65, %c0_66], %646 {strides = array<i32>} : memref<15x16x128xf32, #tpu.memory_space<vmem>>, vector<1x16x128xf32>,
    %cst_67 = arith.constant 0.000000e+00 : f32
    %647 = vector.broadcast %cst_67 : f32 to vector<16x128xf32>
    %648 = arith.maximumf %640, %647 : vector<16x128xf32>
    %c14_68 = arith.constant 14 : index
    %c0_69 = arith.constant 0 : index
    %c0_70 = arith.constant 0 : index
    %649 = vector.load %arg4[%c14_68, %c0_69, %c0_70] : memref<15x16x128xf32, #tpu.memory_space<vmem>>, vector<1x16x128xf32>
    %650 = vector.shape_cast %649 : vector<1x16x128xf32> to vector<16x128xf32>
    %651 = vector.shape_cast %648 : vector<16x128xf32> to vector<1x16x128xf32>
    tpu.vector_store %arg4[%c14_68, %c0_69, %c0_70], %651 {strides = array<i32>} : memref<15x16x128xf32, #tpu.memory_space<vmem>>, vector<1x16x128xf32>,
    return
  }
  func.func @transform_0(%arg0: i32) -> (i32, i32, i32) {
    %c0_i32 = arith.constant 0 : i32
    %c0_i32_0 = arith.constant 0 : i32
    %c0_i32_1 = arith.constant 0 : i32
    return %c0_i32, %c0_i32_0, %arg0 : i32, i32, i32
  }
  func.func @transform_1(%arg0: i32) -> i32 {
    %c0_i32 = arith.constant 0 : i32
    %c0_i32_0 = arith.constant 0 : i32
    return %c0_i32 : i32
  }
  func.func @transform_2(%arg0: i32) -> i32 {
    %c0_i32 = arith.constant 0 : i32
    %c0_i32_0 = arith.constant 0 : i32
    return %c0_i32 : i32
  }
  func.func @transform_3(%arg0: i32) -> (i32, i32, i32) {
    %c0_i32 = arith.constant 0 : i32
    %c0_i32_0 = arith.constant 0 : i32
    %c0_i32_1 = arith.constant 0 : i32
    return %c0_i32, %c0_i32_0, %arg0 : i32, i32, i32
  }
}

</mosaic_0001>

<llo_original>
// kernel: tpu_custom_call.1
$region0: #{tpu_custom_call.1}
  #allocation0 [shape = 'u32[]', space=smem, size = 0x4, offset = 0x4, fixed_abs, tag = 'smem constant byte address 0x4 - core index']
  #allocation1 [shape = 'u32[144,128]{1,0:T(1,128)}', space=vmem, size = 0x12000, scoped, tag = 'internal scratch']
  %s0 = inlined_call_operand.hbm [shape: f32[3,16,256], index: 0, kind: input, shape index: {}]
  %s1 = inlined_call_operand.vmem [shape: f32[81], index: 1, kind: input, shape index: {}]
  %s2 = inlined_call_operand.vmem [shape: f32[3], index: 2, kind: input, shape index: {}]
  %s3 = inlined_call_operand.hbm [shape: f32[15,16,256], index: 3, kind: output, shape index: {}]
  %s4 = sld [smem:[#allocation0]]
  $region57: #{tpu_custom_call.1} parent=0
    _
  %s6 = ssub.s32 1, %s4
  %s7 = scalar_select 0, %s6, %s4
  $region1: #{tpu_custom_call.1} parent=0
    #allocation2 [shape = 'u8[49152]{0}', space=vmem, size = 0xc000, scoped, tag = 'input window, operand 0']
    #allocation3 [shape = 's32[2]{0}', space=sflag, size = 0x8, scoped, tag = 'scoped memory for tpu_custom_call.1']
    #allocation4 [shape = 's32[2]{0}', space=sflag, size = 0x8, scoped, tag = 'scoped memory for tpu_custom_call.1']
    #allocation5 [shape = 's32[2]{0}', space=sflag, size = 0x8, scoped, tag = 'scoped memory for tpu_custom_call.1']
    #allocation6 [shape = 'u8[512]{0}', space=smem, size = 0x200, scoped, tag = 'input window, operand 1, single buffered']
    #allocation7 [shape = 'u8[512]{0}', space=smem, size = 0x200, scoped, tag = 'input window, operand 2, single buffered']
    #allocation8 [shape = 's32[1]{0}', space=sflag, size = 0x4, scoped, tag = 'scoped memory for tpu_custom_call.1']
    #allocation9 [shape = 'u8[245760]{0}', space=vmem, size = 0x3c000, scoped, tag = 'output window, operand 0']
    %8 = vsyncpa [#allocation3], 0
    %s9 = scalar_lea.sflag [#allocation3], 1
    %10 = vsyncpa %s9, 0
    %11 = vsyncpa [#allocation5], 0
    %12 = vsyncpa [#allocation8], 0
    %13 = vsyncpa [#allocation4], 0
    %s14 = scalar_lea.sflag [#allocation4], 1
    %15 = vsyncpa %s14, 0
    loop: start=0, step=1, limit=4
    $region2: #{tpu_custom_call.1} parent=1 // loop_pre_header
      _
    $region3: #{tpu_custom_call.1} parent=1 // loop_header
      %s17 = sphi 0, %s21
      %p18 = scmp.ge.s32.totalorder %s17, 4
      %s27 = sphi 0, %s29
      %s30 = sphi 0, %s27
      %s31 = sphi 0, %s30
      %s47 = sphi 0, %s31
      %s51 = sphi 0, %s51
      %s53 = sphi 0, %s51
      %s54 = sphi 0, %s53
      %s68 = sphi 0, %s54
      %s72 = sphi 0, %s72
      %s74 = sphi 0, %s72
      %s75 = sphi 0, %s74
      %s89 = sphi 0, %s75
      %s95 = sphi 0, %s97
      %s98 = sphi 0, %s95
      %s99 = sphi 0, %s98
      %s115 = sphi 0, %s99
    $region4: #{tpu_custom_call.1} parent=1 // loop_header_branch
      %20 = sbr.rel (%p18) target = $region8
    $region5: #{tpu_custom_call.1} parent=1 // loop_body
      %s22 = ssub.s32 %s17, 1
      %s23 = ssub.s32 %s17, 2
      %s24 = sadd.s32 %s17, 1
      %s25 = ssub.s32 %s17, %s24
      %p26 = scmp.eq.s32.totalorder %s25, 0
      %s28 = sadd.s32 %s27, 1
      %s29 = scalar_select %p26, %s27, %s28
      %p32 = pneg %p26
      %p33 = scmp.eq.s32.totalorder %s17, 1
      %p34 = por %p32, %p33
      %p35 = scmp.ne.s32.totalorder %s27, %s30
      %p36 = scmp.eq.s32.totalorder %s17, 0
      %p37 = por %p35, %p36
      %p38 = scmp.ne.s32.totalorder %s27, %s30
      %p39 = scmp.eq.s32.totalorder %s22, 1
      %p40 = por %p38, %p39
      %p41 = scmp.ne.s32.totalorder %s30, %s31
      %p42 = scmp.eq.s32.totalorder %s22, 0
      %p43 = por %p41, %p42
      %p44 = scmp.ne.s32.totalorder %s30, %s31
      %p45 = scmp.eq.s32.totalorder %s23, 1
      %p46 = por %p44, %p45
      %p48 = scmp.ne.s32.totalorder %s31, %s47
      %p49 = scmp.eq.s32.totalorder %s23, 0
      %p50 = por %p48, %p49
      %s52 = sadd.s32 %s51, 1
      %p55 = scmp.eq.s32.totalorder %s17, 1
      %p56 = scmp.ne.s32.totalorder %s51, %s53
      %p57 = scmp.eq.s32.totalorder %s17, 0
      %p58 = por %p56, %p57
      %p59 = scmp.ne.s32.totalorder %s51, %s53
      %p60 = scmp.eq.s32.totalorder %s22, 1
      %p61 = por %p59, %p60
      %p62 = scmp.ne.s32.totalorder %s53, %s54
      %p63 = scmp.eq.s32.totalorder %s22, 0
      %p64 = por %p62, %p63
      %p65 = scmp.ne.s32.totalorder %s53, %s54
      %p66 = scmp.eq.s32.totalorder %s23, 1
      %p67 = por %p65, %p66
      %p69 = scmp.ne.s32.totalorder %s54, %s68
      %p70 = scmp.eq.s32.totalorder %s23, 0
      %p71 = por %p69, %p70
      %s73 = sadd.s32 %s72, 1
      %p76 = scmp.eq.s32.totalorder %s17, 1
      %p77 = scmp.ne.s32.totalorder %s72, %s74
      %p78 = scmp.eq.s32.totalorder %s17, 0
      %p79 = por %p77, %p78
      %p80 = scmp.ne.s32.totalorder %s72, %s74
      %p81 = scmp.eq.s32.totalorder %s22, 1
      %p82 = por %p80, %p81
      %p83 = scmp.ne.s32.totalorder %s74, %s75
      %p84 = scmp.eq.s32.totalorder %s22, 0
      %p85 = por %p83, %p84
      %p86 = scmp.ne.s32.totalorder %s74, %s75
      %p87 = scmp.eq.s32.totalorder %s23, 1
      %p88 = por %p86, %p87
      %p90 = scmp.ne.s32.totalorder %s75, %s89
      %p91 = scmp.eq.s32.totalorder %s23, 0
      %p92 = por %p90, %p91
      %s93 = ssub.s32 %s17, %s24
      %p94 = scmp.eq.s32.totalorder %s93, 0
      %s96 = sadd.s32 %s95, 1
      %s97 = scalar_select %p94, %s95, %s96
      %p100 = pneg %p94
      %p101 = scmp.eq.s32.totalorder %s17, 1
      %p102 = por %p100, %p101
      %p103 = scmp.ne.s32.totalorder %s95, %s98
      %p104 = scmp.eq.s32.totalorder %s17, 0
      %p105 = por %p103, %p104
      %p106 = scmp.ne.s32.totalorder %s95, %s98
      %p107 = scmp.eq.s32.totalorder %s22, 1
      %p108 = por %p106, %p107
      %p109 = scmp.ne.s32.totalorder %s98, %s99
      %p110 = scmp.eq.s32.totalorder %s22, 0
      %p111 = por %p109, %p110
      %p112 = scmp.ne.s32.totalorder %s98, %s99
      %p113 = scmp.eq.s32.totalorder %s23, 1
      %p114 = por %p112, %p113
      %p116 = scmp.ne.s32.totalorder %s99, %s115
      %p117 = scmp.eq.s32.totalorder %s23, 0
      %p118 = por %p116, %p117
      %p119 = scmp.le.s32.totalorder 1, %s17
      %p120 = scmp.lt.s32.totalorder %s17, 3
      %p121 = pnand %p119, %p120
      %p122 = pneg %p121
      // Predicated region
      $region9: #{tpu_custom_call.1} parent=5 // pred_check
        _
      $region10: #{tpu_custom_call.1} parent=5 // pred_check_branch
        %124 = sbr.rel (%p121) target = $region12
      $region11: #{tpu_custom_call.1} parent=5 // pred_region
        %s125 = ssub.s32 %s17, 1
        // Predicated region
        $region13: #{tpu_custom_call.1} parent=11 // pred_check
          %p126 = pneg %p64
        $region14: #{tpu_custom_call.1} parent=11 // pred_check_branch
          %128 = sbr.rel (%p126) target = $region16
        $region15: #{tpu_custom_call.1} parent=11 // pred_region
          %s130 = ssub.s32 16, 16
          %131 = vsyncadd [#allocation5], %s130
          %s133 = sshll.u32 %s1, 4
          %s134 = int_to_ptr.vmem [resolvable:$true] %s133
          %136 = dma.vmem_to_smem %s134, 16, [#allocation6], [#allocation5]
        $region16: #{tpu_custom_call.1} parent=11 // pred_fallthru
          _
        // Predicated region
        $region17: #{tpu_custom_call.1} parent=11 // pred_check
          %p137 = pneg %p85
        $region18: #{tpu_custom_call.1} parent=11 // pred_check_branch
          %139 = sbr.rel (%p137) target = $region20
        $region19: #{tpu_custom_call.1} parent=11 // pred_region
          %s141 = ssub.s32 16, 16
          %142 = vsyncadd [#allocation8], %s141
          %s144 = sshll.u32 %s2, 4
          %s145 = int_to_ptr.vmem [resolvable:$true] %s144
          %147 = dma.vmem_to_smem %s145, 16, [#allocation7], [#allocation8]
        $region20: #{tpu_custom_call.1} parent=11 // pred_fallthru
          _
      $region12: #{tpu_custom_call.1} parent=5 // pred_fallthru
        _
      %p148 = scmp.lt.s32.totalorder %s17, 2
      // Predicated region
      $region21: #{tpu_custom_call.1} parent=5 // pred_check
        %p149 = pneg %p148
      $region22: #{tpu_custom_call.1} parent=5 // pred_check_branch
        %151 = sbr.rel (%p149) target = $region24
      $region23: #{tpu_custom_call.1} parent=5 // pred_region
        // Predicated region
        $region25: #{tpu_custom_call.1} parent=23 // pred_check
          %p152 = pneg %p37
        $region26: #{tpu_custom_call.1} parent=23 // pred_check_branch
          %154 = sbr.rel (%p152) target = $region28
        $region27: #{tpu_custom_call.1} parent=23 // pred_region
          %s155 = sand.u32 %s27, 1
          %s156 = scalar_lea.sflag [#allocation3], %s155
          %s157 = sand.u32 %s27, 1
          %s158 = smul.addr %s157, 48
          %s159 = scalar_lea.vmem [#allocation2], %s158
          %s161 = ssub.s32 768, 768
          %162 = vsyncadd %s156, %s161
          %s163 = smul.addr %s17, 128
          %s164 = scalar_lea.hbm %s0, %s163
          %s165 = sshll.u32 %s159, 4
          %s166 = int_to_ptr.vmem [resolvable:$true] %s165
          %171 = dma.hbm_to_vmem [thread:$0]  %s164, 768, %s166, %s156, 256, 128, 8
        $region28: #{tpu_custom_call.1} parent=23 // pred_fallthru
          _
      $region24: #{tpu_custom_call.1} parent=5 // pred_fallthru
        _
      %p172 = scmp.le.s32.totalorder 1, %s17
      %p173 = scmp.lt.s32.totalorder %s17, 3
      %p174 = pnand %p172, %p173
      %p175 = pneg %p174
      // Predicated region
      $region29: #{tpu_custom_call.1} parent=5 // pred_check
        _
      $region30: #{tpu_custom_call.1} parent=5 // pred_check_branch
        %177 = sbr.rel (%p174) target = $region32
      $region31: #{tpu_custom_call.1} parent=5 // pred_region
        %s178 = ssub.s32 %s17, 1
        %s179 = sand.u32 %s30, 1
        %s180 = scalar_lea.sflag [#allocation3], %s179
        %s181 = sand.u32 %s30, 1
        %s182 = smul.addr %s181, 48
        %s183 = scalar_lea.vmem [#allocation2], %s182
        // Predicated region
        $region33: #{tpu_custom_call.1} parent=31 // pred_check
          %p184 = pneg %p43
        $region34: #{tpu_custom_call.1} parent=31 // pred_check_branch
          %186 = sbr.rel (%p184) target = $region36
        $region35: #{tpu_custom_call.1} parent=31 // pred_region
          %187 = dma.done %s180, 768
        $region36: #{tpu_custom_call.1} parent=31 // pred_fallthru
          _
        // Predicated region
        $region37: #{tpu_custom_call.1} parent=31 // pred_check
          %p188 = pneg %p64
        $region38: #{tpu_custom_call.1} parent=31 // pred_check_branch
          %190 = sbr.rel (%p188) target = $region40
        $region39: #{tpu_custom_call.1} parent=31 // pred_region
          %191 = dma.done [#allocation5], 16
        $region40: #{tpu_custom_call.1} parent=31 // pred_fallthru
          _
        // Predicated region
        $region41: #{tpu_custom_call.1} parent=31 // pred_check
          %p192 = pneg %p85
        $region42: #{tpu_custom_call.1} parent=31 // pred_check_branch
          %194 = sbr.rel (%p192) target = $region44
        $region43: #{tpu_custom_call.1} parent=31 // pred_region
          %195 = dma.done [#allocation8], 16
        $region44: #{tpu_custom_call.1} parent=31 // pred_fallthru
          _
        %196 = sfence
        %s197 = sand.u32 %s30, 1
        %s198 = scalar_lea.sflag [#allocation3], %s197
        %s199 = sand.u32 %s30, 1
        %s200 = smul.addr %s199, 48
        %s201 = scalar_lea.vmem [#allocation2], %s200
        %p202 = pneg %p43
        %p203 = pneg %p40
        %p204 = pneg %p64
        %p205 = pneg %p61
        %p206 = pneg %p85
        %p207 = pneg %p82
        %p208 = pneg %p111
        %p209 = pneg %p108
        %s210 = sand.u32 %s98, 1
        %s211 = scalar_lea.sflag [#allocation4], %s210
        %s212 = sand.u32 %s98, 1
        %s213 = smul.addr %s212, 240
        %s214 = scalar_lea.vmem [#allocation9], %s213
        %s215 = sld [smem:[#allocation6]]
        %s216 = sld [smem:[#allocation6 + $0x1]]
        %s217 = sld [smem:[#allocation6 + $0x2]]
        %s218 = sld [smem:[#allocation6 + $0x3]]
        %s219 = sld [smem:[#allocation6 + $0x4]]
        %s220 = sld [smem:[#allocation6 + $0x5]]
        %s221 = sld [smem:[#allocation6 + $0x6]]
        %s222 = sld [smem:[#allocation6 + $0x7]]
        %s223 = sld [smem:[#allocation6 + $0x8]]
        %s224 = sld [smem:[#allocation6 + $0x9]]
        %s225 = sld [smem:[#allocation6 + $0xa]]
        %s226 = sld [smem:[#allocation6 + $0xb]]
        %s227 = sld [smem:[#allocation6 + $0xc]]
        %s228 = sld [smem:[#allocation6 + $0xd]]
        %s229 = sld [smem:[#allocation6 + $0xe]]
        %s230 = sld [smem:[#allocation6 + $0xf]]
        %s231 = sld [smem:[#allocation6 + $0x10]]
        %s232 = sld [smem:[#allocation6 + $0x11]]
        %s233 = sld [smem:[#allocation6 + $0x12]]
        %s234 = sld [smem:[#allocation6 + $0x13]]
        %s235 = sld [smem:[#allocation6 + $0x14]]
        %s236 = sld [smem:[#allocation6 + $0x15]]
        %s237 = sld [smem:[#allocation6 + $0x16]]
        %s238 = sld [smem:[#allocation6 + $0x17]]
        %s239 = sld [smem:[#allocation6 + $0x18]]
        %s240 = sld [smem:[#allocation6 + $0x19]]
        %s241 = sld [smem:[#allocation6 + $0x1a]]
        %s242 = sld [smem:[#allocation6 + $0x1b]]
        %s243 = sld [smem:[#allocation6 + $0x1c]]
        %s244 = sld [smem:[#allocation6 + $0x1d]]
        %s245 = sld [smem:[#allocation6 + $0x1e]]
        %s246 = sld [smem:[#allocation6 + $0x1f]]
        %s247 = sld [smem:[#allocation6 + $0x20]]
        %s248 = sld [smem:[#allocation6 + $0x21]]
        %s249 = sld [smem:[#allocation6 + $0x22]]
        %s250 = sld [smem:[#allocation6 + $0x23]]
        %s251 = sld [smem:[#allocation6 + $0x24]]
        %s252 = sld [smem:[#allocation6 + $0x25]]
        %s253 = sld [smem:[#allocation6 + $0x26]]
        %s254 = sld [smem:[#allocation6 + $0x27]]
        %s255 = sld [smem:[#allocation6 + $0x28]]
        %s256 = sld [smem:[#allocation6 + $0x29]]
        %s257 = sld [smem:[#allocation6 + $0x2a]]
        %s258 = sld [smem:[#allocation6 + $0x2b]]
        %s259 = sld [smem:[#allocation6 + $0x2c]]
        %s260 = sld [smem:[#allocation6 + $0x2d]]
        %s261 = sld [smem:[#allocation6 + $0x2e]]
        %s262 = sld [smem:[#allocation6 + $0x2f]]
        %s263 = sld [smem:[#allocation6 + $0x30]]
        %s264 = sld [smem:[#allocation6 + $0x31]]
        %s265 = sld [smem:[#allocation6 + $0x32]]
        %s266 = sld [smem:[#allocation6 + $0x33]]
        %s267 = sld [smem:[#allocation6 + $0x34]]
        %s268 = sld [smem:[#allocation6 + $0x35]]
        %s269 = sld [smem:[#allocation6 + $0x36]]
        %s270 = sld [smem:[#allocation6 + $0x37]]
        %s271 = sld [smem:[#allocation6 + $0x38]]
        %s272 = sld [smem:[#allocation6 + $0x39]]
        %s273 = sld [smem:[#allocation6 + $0x3a]]
        %s274 = sld [smem:[#allocation6 + $0x3b]]
        %s275 = sld [smem:[#allocation6 + $0x3c]]
        %s276 = sld [smem:[#allocation6 + $0x3d]]
        %s277 = sld [smem:[#allocation6 + $0x3e]]
        %s278 = sld [smem:[#allocation6 + $0x3f]]
        %s279 = sld [smem:[#allocation6 + $0x40]]
        %s280 = sld [smem:[#allocation6 + $0x41]]
        %s281 = sld [smem:[#allocation6 + $0x42]]
        %s282 = sld [smem:[#allocation6 + $0x43]]
        %s283 = sld [smem:[#allocation6 + $0x44]]
        %s284 = sld [smem:[#allocation6 + $0x45]]
        %s285 = sld [smem:[#allocation6 + $0x46]]
        %s286 = sld [smem:[#allocation6 + $0x47]]
        %s287 = sld [smem:[#allocation6 + $0x48]]
        %s288 = sld [smem:[#allocation6 + $0x49]]
        %s289 = sld [smem:[#allocation6 + $0x4a]]
        %s290 = sld [smem:[#allocation6 + $0x4b]]
        %s291 = sld [smem:[#allocation6 + $0x4c]]
        %s292 = sld [smem:[#allocation6 + $0x4d]]
        %s293 = sld [smem:[#allocation6 + $0x4e]]
        %s294 = sld [smem:[#allocation6 + $0x4f]]
        %s295 = sld [smem:[#allocation6 + $0x50]]
        %s296 = sld [smem:[#allocation7]]
        %s297 = sld [smem:[#allocation7 + $0x1]]
        %s298 = sld [smem:[#allocation7 + $0x2]]
        %v299 = vlaneseq
        %v300 = vshrl.u32 %v299, 7
        %v301 = vadd.s32 %v300, 8
        %v302 = vlaneseq
        %v303 = vand.u32 %v302, 127
        %vm304 = vcmp.lt.s32.totalorder %v303, 0
        %v305 = vsub.s32 0, %v303
        %v306 = vsel %vm304, %v305, %v303
        %v307 = vshrl.u32 %v306, 4
        %v308 = vand.u32 %v306, 15
        %v309 = vsub.s32 0, %v308
        %v310 = vsel %vm304, %v309, %v308
        %vm311 = vcmp.ne.s32.totalorder %v310, 0
        %vm312 = vcmp.lt.s32.totalorder %v310, 0
        %vm313 = vmand %vm312, %vm311
        %v314 = vadd.s32 %v310, 16
        %v315 = vsel %vm313, %v314, %v310
        %vm316 = vcmp.ge.s32.totalorder %v300, 1
        %vm317 = vcmp.ge.s32.totalorder %v301, 1
        %vm318 = vcmp.le.s32.totalorder %v300, 14
        %vm319 = vcmp.le.s32.totalorder %v301, 14
        %vm320 = vcmp.ge.s32.totalorder %v315, 1
        %vm321 = vcmp.le.s32.totalorder %v315, 14
        %v322 = vsel %vm316, 1, 0
        %v323 = vsel %vm317, 1, 0
        %v324 = vcvt.s32.f32 %v322
        %v325 = vcvt.s32.f32 %v323
        %v326 = vadd.f32 %v324, 1.0
        %v327 = vadd.f32 %v325, 1.0
        %v328 = vsel %vm318, 1, 0
        %v329 = vsel %vm319, 1, 0
        %v330 = vcvt.s32.f32 %v328
        %v331 = vcvt.s32.f32 %v329
        %v332 = vadd.f32 %v326, %v330
        %v333 = vadd.f32 %v327, %v331
        %v334 = vsel %vm320, 1, 0
        %v335 = vcvt.s32.f32 %v334
        %v336 = vadd.f32 %v335, 1.0
        %v337 = vsel %vm321, 1, 0
        %v338 = vcvt.s32.f32 %v337
        %v339 = vadd.f32 %v336, %v338
        %v340 = vmul.f32 %v332, %v339
        %v341 = vmul.f32 %v333, %v339
        %v342 = vrcp.pop %v340
        %v343 = vmul.f32 1.0, %v342
        %v344 = vrcp.pop %v341
        %v345 = vmul.f32 1.0, %v344
        %v346 = vld [vmem:[%s183] sm:$0xff]
        %v347 = vld [vmem:[%s183 + $0x8] sm:$0xff]
        %v348 = vld [vmem:[%s183 + $0x10] sm:$0xff]
        %v349 = vld [vmem:[%s183 + $0x18] sm:$0xff]
        %v350 = vld [vmem:[%s183 + $0x20] sm:$0xff]
        %v351 = vld [vmem:[%s183 + $0x28] sm:$0xff]
        %v352 = vrot.slane %v346, 7
        %v353 = vrot.slane %v348, 7
        %v354 = vrot.slane %v350, 7
        %v355 = vrot.slane %v347, 7
        %v356 = vrot.slane %v349, 7
        %v357 = vrot.slane %v351, 7
        %vm358 = vcmp.lt.s32.totalorder %v300, 1
        %v359 = vsel %vm358, %v352, %v355
        %v360 = vsel %vm358, %v353, %v356
        %v361 = vsel %vm358, %v354, %v357
        %v362 = vsel %vm358, %v355, %v352
        %v363 = vsel %vm358, %v356, %v353
        %v364 = vsel %vm358, %v357, %v354
        %v365 = vrot.slane %v346, 1
        %v366 = vrot.slane %v348, 1
        %v367 = vrot.slane %v350, 1
        %v368 = vrot.slane %v347, 1
        %v369 = vrot.slane %v349, 1
        %v370 = vrot.slane %v351, 1
        %vm371 = vcmp.lt.s32.totalorder %v300, 7
        %v372 = vsel %vm371, %v365, %v368
        %v373 = vsel %vm371, %v366, %v369
        %v374 = vsel %vm371, %v367, %v370
        %v375 = vsel %vm371, %v368, %v365
        %v376 = vsel %vm371, %v369, %v366
        %v377 = vsel %vm371, %v370, %v367
        %v378 = vstv %s296
        %v379 = vadd.f32 %v378, 0.0
        %v380 = vstv %s297
        %v381 = vadd.f32 %v380, 0.0
        %v382 = vstv %s298
        %v383 = vadd.f32 %v382, 0.0
        %384 = vrot.lane.b32.xlu0 %v362, 1
        %v385 = vpop.permute.xlu0 %384
        %386 = vrot.lane.b32.xlu0 %v359, 1
        %v387 = vpop.permute.xlu0 %386
        %388 = vrot.lane.b32.xlu0 %v363, 1
        %v389 = vpop.permute.xlu0 %388
        %390 = vrot.lane.b32.xlu0 %v360, 1
        %v391 = vpop.permute.xlu0 %390
        %392 = vrot.lane.b32.xlu0 %v364, 1
        %v393 = vpop.permute.xlu0 %392
        %394 = vrot.lane.b32.xlu0 %v361, 1
        %v395 = vpop.permute.xlu0 %394
        %vm396 = vmand %vm316, %vm320
        %vm397 = vmand %vm317, %vm320
        %v398 = vsel %vm396, 1, 0
        %v399 = vsel %vm397, 1, 0
        %vm400 = vcmp.eq.s32.totalorder %v398, 1
        %vm401 = vcmp.eq.s32.totalorder %v399, 1
        %v402 = vsel %vm400, %v385, 0.0
        %v403 = vsel %vm401, %v387, 0.0
        %v404 = vsel %vm400, %v389, 0.0
        %v405 = vsel %vm401, %v391, 0.0
        %v406 = vsel %vm400, %v393, 0.0
        %v407 = vsel %vm401, %v395, 0.0
        %v408 = vstv %s215
        %v409 = vmul.f32 %v408, %v402
        %v410 = vmul.f32 %v408, %v403
        %v411 = vadd.f32 %v379, %v409
        %v412 = vadd.f32 %v379, %v410
        %v413 = vstv %s224
        %v414 = vmul.f32 %v413, %v404
        %v415 = vmul.f32 %v413, %v405
        %v416 = vadd.f32 %v411, %v414
        %v417 = vadd.f32 %v412, %v415
        %v418 = vstv %s233
        %v419 = vmul.f32 %v418, %v406
        %v420 = vmul.f32 %v418, %v407
        %v421 = vadd.f32 %v416, %v419
        %v422 = vadd.f32 %v417, %v420
        %v423 = vstv %s242
        %v424 = vmul.f32 %v423, %v402
        %v425 = vmul.f32 %v423, %v403
        %v426 = vadd.f32 %v381, %v424
        %v427 = vadd.f32 %v381, %v425
        %v428 = vstv %s251
        %v429 = vmul.f32 %v428, %v404
        %v430 = vmul.f32 %v428, %v405
        %v431 = vadd.f32 %v426, %v429
        %v432 = vadd.f32 %v427, %v430
        %v433 = vstv %s260
        %v434 = vmul.f32 %v433, %v406
        %v435 = vmul.f32 %v433, %v407
        %v436 = vadd.f32 %v431, %v434
        %v437 = vadd.f32 %v432, %v435
        %v438 = vstv %s269
        %v439 = vmul.f32 %v438, %v402
        %v440 = vmul.f32 %v438, %v403
        %v441 = vadd.f32 %v383, %v439
        %v442 = vadd.f32 %v383, %v440
        %v443 = vstv %s278
        %v444 = vmul.f32 %v443, %v404
        %v445 = vmul.f32 %v443, %v405
        %v446 = vadd.f32 %v441, %v444
        %v447 = vadd.f32 %v442, %v445
        %v448 = vstv %s287
        %v449 = vmul.f32 %v448, %v406
        %v450 = vmul.f32 %v448, %v407
        %v451 = vadd.f32 %v446, %v449
        %v452 = vadd.f32 %v447, %v450
        %vm453 = vcmp.eq.s32.totalorder %v322, 1
        %vm454 = vcmp.eq.s32.totalorder %v323, 1
        %v455 = vsel %vm453, %v362, 0.0
        %v456 = vsel %vm454, %v359, 0.0
        %v457 = vsel %vm453, %v363, 0.0
        %v458 = vsel %vm454, %v360, 0.0
        %v459 = vsel %vm453, %v364, 0.0
        %v460 = vsel %vm454, %v361, 0.0
        %v461 = vadd.f32 %v402, %v455
        %v462 = vadd.f32 %v403, %v456
        %v463 = vadd.f32 %v404, %v457
        %v464 = vadd.f32 %v405, %v458
        %v465 = vadd.f32 %v406, %v459
        %v466 = vadd.f32 %v407, %v460
        %v467 = vstv %s216
        %v468 = vmul.f32 %v467, %v455
        %v469 = vmul.f32 %v467, %v456
        %v470 = vadd.f32 %v421, %v468
        %v471 = vadd.f32 %v422, %v469
        %v472 = vstv %s225
        %v473 = vmul.f32 %v472, %v457
        %v474 = vmul.f32 %v472, %v458
        %v475 = vadd.f32 %v470, %v473
        %v476 = vadd.f32 %v471, %v474
        %v477 = vstv %s234
        %v478 = vmul.f32 %v477, %v459
        %v479 = vmul.f32 %v477, %v460
        %v480 = vadd.f32 %v475, %v478
        %v481 = vadd.f32 %v476, %v479
        %v482 = vstv %s243
        %v483 = vmul.f32 %v482, %v455
        %v484 = vmul.f32 %v482, %v456
        %v485 = vadd.f32 %v436, %v483
        %v486 = vadd.f32 %v437, %v484
        %v487 = vstv %s252
        %v488 = vmul.f32 %v487, %v457
        %v489 = vmul.f32 %v487, %v458
        %v490 = vadd.f32 %v485, %v488
        %v491 = vadd.f32 %v486, %v489
        %v492 = vstv %s261
        %v493 = vmul.f32 %v492, %v459
        %v494 = vmul.f32 %v492, %v460
        %v495 = vadd.f32 %v490, %v493
        %v496 = vadd.f32 %v491, %v494
        %v497 = vstv %s270
        %v498 = vmul.f32 %v497, %v455
        %v499 = vmul.f32 %v497, %v456
        %v500 = vadd.f32 %v451, %v498
        %v501 = vadd.f32 %v452, %v499
        %v502 = vstv %s279
        %v503 = vmul.f32 %v502, %v457
        %v504 = vmul.f32 %v502, %v458
        %v505 = vadd.f32 %v500, %v503
        %v506 = vadd.f32 %v501, %v504
        %v507 = vstv %s288
        %v508 = vmul.f32 %v507, %v459
        %v509 = vmul.f32 %v507, %v460
        %v510 = vadd.f32 %v505, %v508
        %v511 = vadd.f32 %v506, %v509
        %512 = vrot.lane.b32.xlu0 %v362, 127
        %v513 = vpop.permute.xlu0 %512
        %514 = vrot.lane.b32.xlu0 %v359, 127
        %v515 = vpop.permute.xlu0 %514
        %516 = vrot.lane.b32.xlu0 %v363, 127
        %v517 = vpop.permute.xlu0 %516
        %518 = vrot.lane.b32.xlu0 %v360, 127
        %v519 = vpop.permute.xlu0 %518
        %520 = vrot.lane.b32.xlu0 %v364, 127
        %v521 = vpop.permute.xlu0 %520
        %522 = vrot.lane.b32.xlu0 %v361, 127
        %v523 = vpop.permute.xlu0 %522
        %vm524 = vmand %vm316, %vm321
        %vm525 = vmand %vm317, %vm321
        %v526 = vsel %vm524, 1, 0
        %v527 = vsel %vm525, 1, 0
        %vm528 = vcmp.eq.s32.totalorder %v526, 1
        %vm529 = vcmp.eq.s32.totalorder %v527, 1
        %v530 = vsel %vm528, %v513, 0.0
        %v531 = vsel %vm529, %v515, 0.0
        %v532 = vsel %vm528, %v517, 0.0
        %v533 = vsel %vm529, %v519, 0.0
        %v534 = vsel %vm528, %v521, 0.0
        %v535 = vsel %vm529, %v523, 0.0
        %v536 = vadd.f32 %v461, %v530
        %v537 = vadd.f32 %v462, %v531
        %v538 = vadd.f32 %v463, %v532
        %v539 = vadd.f32 %v464, %v533
        %v540 = vadd.f32 %v465, %v534
        %v541 = vadd.f32 %v466, %v535
        %v542 = vstv %s217
        %v543 = vmul.f32 %v542, %v530
        %v544 = vmul.f32 %v542, %v531
        %v545 = vadd.f32 %v480, %v543
        %v546 = vadd.f32 %v481, %v544
        %v547 = vstv %s226
        %v548 = vmul.f32 %v547, %v532
        %v549 = vmul.f32 %v547, %v533
        %v550 = vadd.f32 %v545, %v548
        %v551 = vadd.f32 %v546, %v549
        %v552 = vstv %s235
        %v553 = vmul.f32 %v552, %v534
        %v554 = vmul.f32 %v552, %v535
        %v555 = vadd.f32 %v550, %v553
        %v556 = vadd.f32 %v551, %v554
        %v557 = vstv %s244
        %v558 = vmul.f32 %v557, %v530
        %v559 = vmul.f32 %v557, %v531
        %v560 = vadd.f32 %v495, %v558
        %v561 = vadd.f32 %v496, %v559
        %v562 = vstv %s253
        %v563 = vmul.f32 %v562, %v532
        %v564 = vmul.f32 %v562, %v533
        %v565 = vadd.f32 %v560, %v563
        %v566 = vadd.f32 %v561, %v564
        %v567 = vstv %s262
        %v568 = vmul.f32 %v567, %v534
        %v569 = vmul.f32 %v567, %v535
        %v570 = vadd.f32 %v565, %v568
        %v571 = vadd.f32 %v566, %v569
        %v572 = vstv %s271
        %v573 = vmul.f32 %v572, %v530
        %v574 = vmul.f32 %v572, %v531
        %v575 = vadd.f32 %v510, %v573
        %v576 = vadd.f32 %v511, %v574
        %v577 = vstv %s280
        %v578 = vmul.f32 %v577, %v532
        %v579 = vmul.f32 %v577, %v533
        %v580 = vadd.f32 %v575, %v578
        %v581 = vadd.f32 %v576, %v579
        %v582 = vstv %s289
        %v583 = vmul.f32 %v582, %v534
        %v584 = vmul.f32 %v582, %v535
        %v585 = vadd.f32 %v580, %v583
        %v586 = vadd.f32 %v581, %v584
        %587 = vrot.lane.b32.xlu0 %v346, 1
        %v588 = vpop.permute.xlu0 %587
        %589 = vrot.lane.b32.xlu0 %v347, 1
        %v590 = vpop.permute.xlu0 %589
        %591 = vrot.lane.b32.xlu0 %v348, 1
        %v592 = vpop.permute.xlu0 %591
        %593 = vrot.lane.b32.xlu0 %v349, 1
        %v594 = vpop.permute.xlu0 %593
        %595 = vrot.lane.b32.xlu0 %v350, 1
        %v596 = vpop.permute.xlu0 %595
        %597 = vrot.lane.b32.xlu0 %v351, 1
        %v598 = vpop.permute.xlu0 %597
        %vm599 = vcmp.eq.s32.totalorder %v334, 1
        %v600 = vsel %vm599, %v588, 0.0
        %v601 = vsel %vm599, %v590, 0.0
        %v602 = vsel %vm599, %v592, 0.0
        %v603 = vsel %vm599, %v594, 0.0
        %v604 = vsel %vm599, %v596, 0.0
        %v605 = vsel %vm599, %v598, 0.0
        %v606 = vadd.f32 %v536, %v600
        %v607 = vadd.f32 %v537, %v601
        %v608 = vadd.f32 %v538, %v602
        %v609 = vadd.f32 %v539, %v603
        %v610 = vadd.f32 %v540, %v604
        %v611 = vadd.f32 %v541, %v605
        %v612 = vstv %s218
        %v613 = vmul.f32 %v612, %v600
        %v614 = vmul.f32 %v612, %v601
        %v615 = vadd.f32 %v555, %v613
        %v616 = vadd.f32 %v556, %v614
        %v617 = vstv %s227
        %v618 = vmul.f32 %v617, %v602
        %v619 = vmul.f32 %v617, %v603
        %v620 = vadd.f32 %v615, %v618
        %v621 = vadd.f32 %v616, %v619
        %v622 = vstv %s236
        %v623 = vmul.f32 %v622, %v604
        %v624 = vmul.f32 %v622, %v605
        %v625 = vadd.f32 %v620, %v623
        %v626 = vadd.f32 %v621, %v624
        %v627 = vstv %s245
        %v628 = vmul.f32 %v627, %v600
        %v629 = vmul.f32 %v627, %v601
        %v630 = vadd.f32 %v570, %v628
        %v631 = vadd.f32 %v571, %v629
        %v632 = vstv %s254
        %v633 = vmul.f32 %v632, %v602
        %v634 = vmul.f32 %v632, %v603
        %v635 = vadd.f32 %v630, %v633
        %v636 = vadd.f32 %v631, %v634
        %v637 = vstv %s263
        %v638 = vmul.f32 %v637, %v604
        %v639 = vmul.f32 %v637, %v605
        %v640 = vadd.f32 %v635, %v638
        %v641 = vadd.f32 %v636, %v639
        %v642 = vstv %s272
        %v643 = vmul.f32 %v642, %v600
        %v644 = vmul.f32 %v642, %v601
        %v645 = vadd.f32 %v585, %v643
        %v646 = vadd.f32 %v586, %v644
        %v647 = vstv %s281
        %v648 = vmul.f32 %v647, %v602
        %v649 = vmul.f32 %v647, %v603
        %v650 = vadd.f32 %v645, %v648
        %v651 = vadd.f32 %v646, %v649
        %v652 = vstv %s290
        %v653 = vmul.f32 %v652, %v604
        %v654 = vmul.f32 %v652, %v605
        %v655 = vadd.f32 %v650, %v653
        %v656 = vadd.f32 %v651, %v654
        %v657 = vadd.f32 %v606, %v346
        %v658 = vadd.f32 %v607, %v347
        %v659 = vadd.f32 %v608, %v348
        %v660 = vadd.f32 %v609, %v349
        %v661 = vadd.f32 %v610, %v350
        %v662 = vadd.f32 %v611, %v351
        %v663 = vstv %s219
        %v664 = vmul.f32 %v663, %v346
        %v665 = vmul.f32 %v663, %v347
        %v666 = vadd.f32 %v625, %v664
        %v667 = vadd.f32 %v626, %v665
        %v668 = vstv %s228
        %v669 = vmul.f32 %v668, %v348
        %v670 = vmul.f32 %v668, %v349
        %v671 = vadd.f32 %v666, %v669
        %v672 = vadd.f32 %v667, %v670
        %v673 = vstv %s237
        %v674 = vmul.f32 %v673, %v350
        %v675 = vmul.f32 %v673, %v351
        %v676 = vadd.f32 %v671, %v674
        %v677 = vadd.f32 %v672, %v675
        %v678 = vstv %s246
        %v679 = vmul.f32 %v678, %v346
        %v680 = vmul.f32 %v678, %v347
        %v681 = vadd.f32 %v640, %v679
        %v682 = vadd.f32 %v641, %v680
        %v683 = vstv %s255
        %v684 = vmul.f32 %v683, %v348
        %v685 = vmul.f32 %v683, %v349
        %v686 = vadd.f32 %v681, %v684
        %v687 = vadd.f32 %v682, %v685
        %v688 = vstv %s264
        %v689 = vmul.f32 %v688, %v350
        %v690 = vmul.f32 %v688, %v351
        %v691 = vadd.f32 %v686, %v689
        %v692 = vadd.f32 %v687, %v690
        %v693 = vstv %s273
        %v694 = vmul.f32 %v693, %v346
        %v695 = vmul.f32 %v693, %v347
        %v696 = vadd.f32 %v655, %v694
        %v697 = vadd.f32 %v656, %v695
        %v698 = vstv %s282
        %v699 = vmul.f32 %v698, %v348
        %v700 = vmul.f32 %v698, %v349
        %v701 = vadd.f32 %v696, %v699
        %v702 = vadd.f32 %v697, %v700
        %v703 = vstv %s291
        %v704 = vmul.f32 %v703, %v350
        %v705 = vmul.f32 %v703, %v351
        %v706 = vadd.f32 %v701, %v704
        %v707 = vadd.f32 %v702, %v705
        %708 = vrot.lane.b32.xlu0 %v346, 127
        %v709 = vpop.permute.xlu0 %708
        %710 = vrot.lane.b32.xlu0 %v347, 127
        %v711 = vpop.permute.xlu0 %710
        %712 = vrot.lane.b32.xlu0 %v348, 127
        %v713 = vpop.permute.xlu0 %712
        %714 = vrot.lane.b32.xlu0 %v349, 127
        %v715 = vpop.permute.xlu0 %714
        %716 = vrot.lane.b32.xlu0 %v350, 127
        %v717 = vpop.permute.xlu0 %716
        %718 = vrot.lane.b32.xlu0 %v351, 127
        %v719 = vpop.permute.xlu0 %718
        %vm720 = vcmp.eq.s32.totalorder %v337, 1
        %v721 = vsel %vm720, %v709, 0.0
        %v722 = vsel %vm720, %v711, 0.0
        %v723 = vsel %vm720, %v713, 0.0
        %v724 = vsel %vm720, %v715, 0.0
        %v725 = vsel %vm720, %v717, 0.0
        %v726 = vsel %vm720, %v719, 0.0
        %v727 = vadd.f32 %v657, %v721
        %v728 = vadd.f32 %v658, %v722
        %v729 = vadd.f32 %v659, %v723
        %v730 = vadd.f32 %v660, %v724
        %v731 = vadd.f32 %v661, %v725
        %v732 = vadd.f32 %v662, %v726
        %v733 = vstv %s220
        %v734 = vmul.f32 %v733, %v721
        %v735 = vmul.f32 %v733, %v722
        %v736 = vadd.f32 %v676, %v734
        %v737 = vadd.f32 %v677, %v735
        %v738 = vstv %s229
        %v739 = vmul.f32 %v738, %v723
        %v740 = vmul.f32 %v738, %v724
        %v741 = vadd.f32 %v736, %v739
        %v742 = vadd.f32 %v737, %v740
        %v743 = vstv %s238
        %v744 = vmul.f32 %v743, %v725
        %v745 = vmul.f32 %v743, %v726
        %v746 = vadd.f32 %v741, %v744
        %v747 = vadd.f32 %v742, %v745
        %v748 = vstv %s247
        %v749 = vmul.f32 %v748, %v721
        %v750 = vmul.f32 %v748, %v722
        %v751 = vadd.f32 %v691, %v749
        %v752 = vadd.f32 %v692, %v750
        %v753 = vstv %s256
        %v754 = vmul.f32 %v753, %v723
        %v755 = vmul.f32 %v753, %v724
        %v756 = vadd.f32 %v751, %v754
        %v757 = vadd.f32 %v752, %v755
        %v758 = vstv %s265
        %v759 = vmul.f32 %v758, %v725
        %v760 = vmul.f32 %v758, %v726
        %v761 = vadd.f32 %v756, %v759
        %v762 = vadd.f32 %v757, %v760
        %v763 = vstv %s274
        %v764 = vmul.f32 %v763, %v721
        %v765 = vmul.f32 %v763, %v722
        %v766 = vadd.f32 %v706, %v764
        %v767 = vadd.f32 %v707, %v765
        %v768 = vstv %s283
        %v769 = vmul.f32 %v768, %v723
        %v770 = vmul.f32 %v768, %v724
        %v771 = vadd.f32 %v766, %v769
        %v772 = vadd.f32 %v767, %v770
        %v773 = vstv %s292
        %v774 = vmul.f32 %v773, %v725
        %v775 = vmul.f32 %v773, %v726
        %v776 = vadd.f32 %v771, %v774
        %v777 = vadd.f32 %v772, %v775
        %778 = vrot.lane.b32.xlu0 %v372, 1
        %v779 = vpop.permute.xlu0 %778
        %780 = vrot.lane.b32.xlu0 %v375, 1
        %v781 = vpop.permute.xlu0 %780
        %782 = vrot.lane.b32.xlu0 %v373, 1
        %v783 = vpop.permute.xlu0 %782
        %784 = vrot.lane.b32.xlu0 %v376, 1
        %v785 = vpop.permute.xlu0 %784
        %786 = vrot.lane.b32.xlu0 %v374, 1
        %v787 = vpop.permute.xlu0 %786
        %788 = vrot.lane.b32.xlu0 %v377, 1
        %v789 = vpop.permute.xlu0 %788
        %vm790 = vmand %vm318, %vm320
        %vm791 = vmand %vm319, %vm320
        %v792 = vsel %vm790, 1, 0
        %v793 = vsel %vm791, 1, 0
        %vm794 = vcmp.eq.s32.totalorder %v792, 1
        %vm795 = vcmp.eq.s32.totalorder %v793, 1
        %v796 = vsel %vm794, %v779, 0.0
        %v797 = vsel %vm795, %v781, 0.0
        %v798 = vsel %vm794, %v783, 0.0
        %v799 = vsel %vm795, %v785, 0.0
        %v800 = vsel %vm794, %v787, 0.0
        %v801 = vsel %vm795, %v789, 0.0
        %v802 = vadd.f32 %v727, %v796
        %v803 = vadd.f32 %v728, %v797
        %v804 = vadd.f32 %v729, %v798
        %v805 = vadd.f32 %v730, %v799
        %v806 = vadd.f32 %v731, %v800
        %v807 = vadd.f32 %v732, %v801
        %v808 = vstv %s221
        %v809 = vmul.f32 %v808, %v796
        %v810 = vmul.f32 %v808, %v797
        %v811 = vadd.f32 %v746, %v809
        %v812 = vadd.f32 %v747, %v810
        %v813 = vstv %s230
        %v814 = vmul.f32 %v813, %v798
        %v815 = vmul.f32 %v813, %v799
        %v816 = vadd.f32 %v811, %v814
        %v817 = vadd.f32 %v812, %v815
        %v818 = vstv %s239
        %v819 = vmul.f32 %v818, %v800
        %v820 = vmul.f32 %v818, %v801
        %v821 = vadd.f32 %v816, %v819
        %v822 = vadd.f32 %v817, %v820
        %v823 = vstv %s248
        %v824 = vmul.f32 %v823, %v796
        %v825 = vmul.f32 %v823, %v797
        %v826 = vadd.f32 %v761, %v824
        %v827 = vadd.f32 %v762, %v825
        %v828 = vstv %s257
        %v829 = vmul.f32 %v828, %v798
        %v830 = vmul.f32 %v828, %v799
        %v831 = vadd.f32 %v826, %v829
        %v832 = vadd.f32 %v827, %v830
        %v833 = vstv %s266
        %v834 = vmul.f32 %v833, %v800
        %v835 = vmul.f32 %v833, %v801
        %v836 = vadd.f32 %v831, %v834
        %v837 = vadd.f32 %v832, %v835
        %v838 = vstv %s275
        %v839 = vmul.f32 %v838, %v796
        %v840 = vmul.f32 %v838, %v797
        %v841 = vadd.f32 %v776, %v839
        %v842 = vadd.f32 %v777, %v840
        %v843 = vstv %s284
        %v844 = vmul.f32 %v843, %v798
        %v845 = vmul.f32 %v843, %v799
        %v846 = vadd.f32 %v841, %v844
        %v847 = vadd.f32 %v842, %v845
        %v848 = vstv %s293
        %v849 = vmul.f32 %v848, %v800
        %v850 = vmul.f32 %v848, %v801
        %v851 = vadd.f32 %v846, %v849
        %v852 = vadd.f32 %v847, %v850
        %vm853 = vcmp.eq.s32.totalorder %v328, 1
        %vm854 = vcmp.eq.s32.totalorder %v329, 1
        %v855 = vsel %vm853, %v372, 0.0
        %v856 = vsel %vm854, %v375, 0.0
        %v857 = vsel %vm853, %v373, 0.0
        %v858 = vsel %vm854, %v376, 0.0
        %v859 = vsel %vm853, %v374, 0.0
        %v860 = vsel %vm854, %v377, 0.0
        %v861 = vadd.f32 %v802, %v855
        %v862 = vadd.f32 %v803, %v856
        %v863 = vadd.f32 %v804, %v857
        %v864 = vadd.f32 %v805, %v858
        %v865 = vadd.f32 %v806, %v859
        %v866 = vadd.f32 %v807, %v860
        %v867 = vstv %s222
        %v868 = vmul.f32 %v867, %v855
        %v869 = vmul.f32 %v867, %v856
        %v870 = vadd.f32 %v821, %v868
        %v871 = vadd.f32 %v822, %v869
        %v872 = vstv %s231
        %v873 = vmul.f32 %v872, %v857
        %v874 = vmul.f32 %v872, %v858
        %v875 = vadd.f32 %v870, %v873
        %v876 = vadd.f32 %v871, %v874
        %v877 = vstv %s240
        %v878 = vmul.f32 %v877, %v859
        %v879 = vmul.f32 %v877, %v860
        %v880 = vadd.f32 %v875, %v878
        %v881 = vadd.f32 %v876, %v879
        %v882 = vstv %s249
        %v883 = vmul.f32 %v882, %v855
        %v884 = vmul.f32 %v882, %v856
        %v885 = vadd.f32 %v836, %v883
        %v886 = vadd.f32 %v837, %v884
        %v887 = vstv %s258
        %v888 = vmul.f32 %v887, %v857
        %v889 = vmul.f32 %v887, %v858
        %v890 = vadd.f32 %v885, %v888
        %v891 = vadd.f32 %v886, %v889
        %v892 = vstv %s267
        %v893 = vmul.f32 %v892, %v859
        %v894 = vmul.f32 %v892, %v860
        %v895 = vadd.f32 %v890, %v893
        %v896 = vadd.f32 %v891, %v894
        %v897 = vstv %s276
        %v898 = vmul.f32 %v897, %v855
        %v899 = vmul.f32 %v897, %v856
        %v900 = vadd.f32 %v851, %v898
        %v901 = vadd.f32 %v852, %v899
        %v902 = vstv %s285
        %v903 = vmul.f32 %v902, %v857
        %v904 = vmul.f32 %v902, %v858
        %v905 = vadd.f32 %v900, %v903
        %v906 = vadd.f32 %v901, %v904
        %v907 = vstv %s294
        %v908 = vmul.f32 %v907, %v859
        %v909 = vmul.f32 %v907, %v860
        %v910 = vadd.f32 %v905, %v908
        %v911 = vadd.f32 %v906, %v909
        %912 = vrot.lane.b32.xlu0 %v372, 127
        %v913 = vpop.permute.xlu0 %912
        %914 = vrot.lane.b32.xlu0 %v375, 127
        %v915 = vpop.permute.xlu0 %914
        %916 = vrot.lane.b32.xlu0 %v373, 127
        %v917 = vpop.permute.xlu0 %916
        %918 = vrot.lane.b32.xlu0 %v376, 127
        %v919 = vpop.permute.xlu0 %918
        %920 = vrot.lane.b32.xlu0 %v374, 127
        %v921 = vpop.permute.xlu0 %920
        %922 = vrot.lane.b32.xlu0 %v377, 127
        %v923 = vpop.permute.xlu0 %922
        %vm924 = vmand %vm318, %vm321
        %vm925 = vmand %vm319, %vm321
        %v926 = vsel %vm924, 1, 0
        %v927 = vsel %vm925, 1, 0
        %vm928 = vcmp.eq.s32.totalorder %v926, 1
        %vm929 = vcmp.eq.s32.totalorder %v927, 1
        %v930 = vsel %vm928, %v913, 0.0
        %v931 = vsel %vm929, %v915, 0.0
        %v932 = vsel %vm928, %v917, 0.0
        %v933 = vsel %vm929, %v919, 0.0
        %v934 = vsel %vm928, %v921, 0.0
        %v935 = vsel %vm929, %v923, 0.0
        %v936 = vadd.f32 %v861, %v930
        %v937 = vadd.f32 %v862, %v931
        %v938 = vadd.f32 %v863, %v932
        %v939 = vadd.f32 %v864, %v933
        %v940 = vadd.f32 %v865, %v934
        %v941 = vadd.f32 %v866, %v935
        %v942 = vstv %s223
        %v943 = vmul.f32 %v942, %v930
        %v944 = vmul.f32 %v942, %v931
        %v945 = vadd.f32 %v880, %v943
        %v946 = vadd.f32 %v881, %v944
        %v947 = vstv %s232
        %v948 = vmul.f32 %v947, %v932
        %v949 = vmul.f32 %v947, %v933
        %v950 = vadd.f32 %v945, %v948
        %v951 = vadd.f32 %v946, %v949
        %v952 = vstv %s241
        %v953 = vmul.f32 %v952, %v934
        %v954 = vmul.f32 %v952, %v935
        %v955 = vadd.f32 %v950, %v953
        %v956 = vadd.f32 %v951, %v954
        %v957 = vstv %s250
        %v958 = vmul.f32 %v957, %v930
        %v959 = vmul.f32 %v957, %v931
        %v960 = vadd.f32 %v895, %v958
        %v961 = vadd.f32 %v896, %v959
        %v962 = vstv %s259
        %v963 = vmul.f32 %v962, %v932
        %v964 = vmul.f32 %v962, %v933
        %v965 = vadd.f32 %v960, %v963
        %v966 = vadd.f32 %v961, %v964
        %v967 = vstv %s268
        %v968 = vmul.f32 %v967, %v934
        %v969 = vmul.f32 %v967, %v935
        %v970 = vadd.f32 %v965, %v968
        %v971 = vadd.f32 %v966, %v969
        %v972 = vstv %s277
        %v973 = vmul.f32 %v972, %v930
        %v974 = vmul.f32 %v972, %v931
        %v975 = vadd.f32 %v910, %v973
        %v976 = vadd.f32 %v911, %v974
        %v977 = vstv %s286
        %v978 = vmul.f32 %v977, %v932
        %v979 = vmul.f32 %v977, %v933
        %v980 = vadd.f32 %v975, %v978
        %v981 = vadd.f32 %v976, %v979
        %v982 = vstv %s295
        %v983 = vmul.f32 %v982, %v934
        %v984 = vmul.f32 %v982, %v935
        %v985 = vadd.f32 %v980, %v983
        %v986 = vadd.f32 %v981, %v984
        %v987 = vmul.f32 %v936, %v343
        %v988 = vmul.f32 %v937, %v345
        %v989 = vmul.f32 %v938, %v343
        %v990 = vmul.f32 %v939, %v345
        %v991 = vmul.f32 %v940, %v343
        %v992 = vmul.f32 %v941, %v345
        %s993 = scalar_lea.vmem %s214, 96 [#allocation9]
        %994 = vst [vmem:[%s993] sm:$0xff] %v987
        %995 = vst [vmem:[%s993 + $0x8] sm:$0xff] %v988
        %996 = vst [vmem:[%s993 + $0x10] sm:$0xff] %v989
        %997 = vst [vmem:[%s993 + $0x18] sm:$0xff] %v990
        %998 = vst [vmem:[%s993 + $0x20] sm:$0xff] %v991
        %999 = vst [vmem:[%s993 + $0x28] sm:$0xff] %v992
        %s1000 = scalar_lea.vmem %s214, 144 [#allocation9]
        %1001 = vst [vmem:[%s1000] sm:$0xff] %v346
        %1002 = vst [vmem:[%s1000 + $0x8] sm:$0xff] %v347
        %1003 = vst [vmem:[%s1000 + $0x10] sm:$0xff] %v348
        %1004 = vst [vmem:[%s1000 + $0x18] sm:$0xff] %v349
        %1005 = vst [vmem:[%s1000 + $0x20] sm:$0xff] %v350
        %1006 = vst [vmem:[%s1000 + $0x28] sm:$0xff] %v351
        %v1007 = vtanh.pop %v955
        %v1008 = vtanh.pop %v956
        %v1009 = vadd.f32 %v1007, %v987
        %v1010 = vadd.f32 %v1008, %v988
        %1011 = vst [vmem:[%s214] sm:$0xff] %v955
        %1012 = vst [vmem:[%s214 + $0x8] sm:$0xff] %v956
        %s1013 = scalar_lea.vmem %s214, 48 [#allocation9]
        %1014 = vst [vmem:[%s1013] sm:$0xff] %v1009
        %1015 = vst [vmem:[%s1013 + $0x8] sm:$0xff] %v1010
        %v1016 = vmax.f32 %v1009, 0.0
        %v1017 = vmax.f32 %v1010, 0.0
        %s1018 = scalar_lea.vmem %s214, 192 [#allocation9]
        %1019 = vst [vmem:[%s1018] sm:$0xff] %v1016
        %1020 = vst [vmem:[%s1018 + $0x8] sm:$0xff] %v1017
        %v1021 = vtanh.pop %v970
        %v1022 = vtanh.pop %v971
        %v1023 = vadd.f32 %v1021, %v989
        %v1024 = vadd.f32 %v1022, %v990
        %s1025 = scalar_lea.vmem %s214, 16 [#allocation9]
        %1026 = vst [vmem:[%s1025] sm:$0xff] %v970
        %1027 = vst [vmem:[%s1025 + $0x8] sm:$0xff] %v971
        %s1028 = scalar_lea.vmem %s214, 64 [#allocation9]
        %1029 = vst [vmem:[%s1028] sm:$0xff] %v1023
        %1030 = vst [vmem:[%s1028 + $0x8] sm:$0xff] %v1024
        %v1031 = vmax.f32 %v1023, 0.0
        %v1032 = vmax.f32 %v1024, 0.0
        %s1033 = scalar_lea.vmem %s214, 208 [#allocation9]
        %1034 = vst [vmem:[%s1033] sm:$0xff] %v1031
        %1035 = vst [vmem:[%s1033 + $0x8] sm:$0xff] %v1032
        %v1036 = vtanh.pop %v985
        %v1037 = vtanh.pop %v986
        %v1038 = vadd.f32 %v1036, %v991
        %v1039 = vadd.f32 %v1037, %v992
        %s1040 = scalar_lea.vmem %s214, 32 [#allocation9]
        %1041 = vst [vmem:[%s1040] sm:$0xff] %v985
        %1042 = vst [vmem:[%s1040 + $0x8] sm:$0xff] %v986
        %s1043 = scalar_lea.vmem %s214, 80 [#allocation9]
        %1044 = vst [vmem:[%s1043] sm:$0xff] %v1038
        %1045 = vst [vmem:[%s1043 + $0x8] sm:$0xff] %v1039
        %v1046 = vmax.f32 %v1038, 0.0
        %v1047 = vmax.f32 %v1039, 0.0
        %s1048 = scalar_lea.vmem %s214, 224 [#allocation9]
        %1049 = vst [vmem:[%s1048] sm:$0xff] %v1046
        %1050 = vst [vmem:[%s1048 + $0x8] sm:$0xff] %v1047
        %s1051 = sand.u32 %s98, 1
        %s1052 = scalar_lea.sflag [#allocation4], %s1051
        %s1053 = sand.u32 %s98, 1
        %s1054 = smul.addr %s1053, 240
        %s1055 = scalar_lea.vmem [#allocation9], %s1054
        // Predicated region
        $region45: #{tpu_custom_call.1} parent=31 // pred_check
          %p1056 = pneg %p108
        $region46: #{tpu_custom_call.1} parent=31 // pred_check_branch
          %1058 = sbr.rel (%p1056) target = $region48
        $region47: #{tpu_custom_call.1} parent=31 // pred_region
          %s1060 = ssub.s32 3840, 3840
          %1061 = vsyncadd %s1052, %s1060
          %s1062 = smul.addr %s22, 128
          %s1063 = scalar_lea.hbm %s3, %s1062
          %s1064 = sshll.u32 %s1055, 4
          %s1065 = int_to_ptr.vmem [resolvable:$true] %s1064
          %1070 = dma.vmem_to_hbm [thread:$0]  %s1065, 3840, %s1063, %s1052, 128, 256, 8
        $region48: #{tpu_custom_call.1} parent=31 // pred_fallthru
          _
      $region32: #{tpu_custom_call.1} parent=5 // pred_fallthru
        _
      %p1071 = scmp.le.s32.totalorder 2, %s17
      // Predicated region
      $region49: #{tpu_custom_call.1} parent=5 // pred_check
        %p1072 = pneg %p1071
      $region50: #{tpu_custom_call.1} parent=5 // pred_check_branch
        %1074 = sbr.rel (%p1072) target = $region52
      $region51: #{tpu_custom_call.1} parent=5 // pred_region
        %s1075 = ssub.s32 %s17, 2
        // Predicated region
        $region53: #{tpu_custom_call.1} parent=51 // pred_check
          %p1076 = pneg %p114
        $region54: #{tpu_custom_call.1} parent=51 // pred_check_branch
          %1078 = sbr.rel (%p1076) target = $region56
        $region55: #{tpu_custom_call.1} parent=51 // pred_region
          %s1079 = sand.u32 %s99, 1
          %s1080 = scalar_lea.sflag [#allocation4], %s1079
          %s1081 = sand.u32 %s99, 1
          %s1082 = smul.addr %s1081, 240
          %s1083 = scalar_lea.vmem [#allocation9], %s1082
          %1084 = dma.done %s1080, 3840
        $region56: #{tpu_custom_call.1} parent=51 // pred_fallthru
          _
      $region52: #{tpu_custom_call.1} parent=5 // pred_fallthru
        _
    $region6: #{tpu_custom_call.1} parent=1 // loop_footer
      %s21 = sadd.s32 1, %s17
    $region7: #{tpu_custom_call.1} parent=1 // loop_footer_branch
      %16 = sbr.rel target = $region3
    $region8: #{tpu_custom_call.1} parent=1 // loop_exit
      _
    %1085 = vsyncpa [#allocation3], 1
    %s1086 = scalar_lea.sflag [#allocation3], 1
    %1087 = vsyncpa %s1086, 1
    %1088 = vsyncpa [#allocation4], 1
    %s1089 = scalar_lea.sflag [#allocation4], 1
    %1090 = vsyncpa %s1089, 1
    %1091 = vsyncpa [#allocation5], 1
    %s1092 = scalar_lea.sflag [#allocation5], 1
    %1093 = vsyncpa %s1092, 1
    %1094 = vsyncpa [#allocation8], 1

</llo_original>
